<compile_context>
chip_gen: v6e
topology: v6e:2x2x1
jax: 0.10.0
libtpu: 0.0.40
codegen_flags: <defaults>
</compile_context>

<pallas_src>
import functools

import jax
import jax.numpy as jnp
from jax.experimental import pallas as pl
from jax.experimental.pallas import tpu as pltpu

EPS = 1e-5
NEG_SLOPE = 0.1
STAT_ROWS = 8  # sublane-aligned stats block; row 0 = sum, row 1 = sum of squares


def _round_up(x, m):
    return ((x + m - 1) // m) * m


# --------------------------------------------------------------------------------------
# Phase 1: conv-as-matmul on the MXU + per-(M-tile) channel sum / sum-of-squares.
# --------------------------------------------------------------------------------------
def conv_stats_kernel(p_ref, w_ref, y_ref, stat_ref, acc_ref):
    kk = pl.program_id(2)

    @pl.when(kk == 0)
    def _init():
        acc_ref[...] = jnp.zeros_like(acc_ref)

    # bf16 x bf16 -> f32 accumulation on the MXU.
    acc_ref[...] += jnp.dot(p_ref[...], w_ref[...],
                            preferred_element_type=jnp.float32)

    @pl.when(kk == pl.num_programs(2) - 1)
    def _finalize():
        y = acc_ref[...]
        # bf16 writeback halves the HBM bytes of the biggest intermediate. Stats are taken
        # from the f32 accumulator (slightly tighter than the stored bf16 y; documented).
        y_ref[...] = y.astype(y_ref.dtype)
        s = jnp.sum(y, axis=0, keepdims=True)           # (1, tn)
        sq = jnp.sum(y * y, axis=0, keepdims=True)      # (1, tn)
        row = jax.lax.broadcasted_iota(jnp.int32, stat_ref.shape, 0)
        stat_ref[...] = jnp.where(
            row == 0, jnp.broadcast_to(s, stat_ref.shape),
            jnp.where(row == 1, jnp.broadcast_to(sq, stat_ref.shape), 0.0))


# --------------------------------------------------------------------------------------
# Phase 2: fused BatchNorm (pre-folded per-channel scale/shift) + LeakyReLU(0.1).
# --------------------------------------------------------------------------------------
def bn_act_kernel(y_ref, scale_ref, shift_ref, o_ref):
    y = y_ref[...].astype(jnp.float32)
    z = y * scale_ref[...] + shift_ref[...]
    o_ref[...] = jnp.where(z > 0, z, NEG_SLOPE * z).astype(o_ref.dtype)


def im2col_nhwc(x_nhwc, kh, kw, stride, padding):
    """(N*OH*OW, C_in*KH*KW) patches, column order (c_in, kh, kw) to match
    PyTorch's weight.reshape(C_out, -1). Runs in bf16 (x is cast before calling)."""
    n, h, w, c = x_nhwc.shape
    xp = jnp.pad(x_nhwc, ((0, 0), (padding, padding), (padding, padding), (0, 0)))
    oh = (h + 2 * padding - kh) // stride + 1
    ow = (w + 2 * padding - kw) // stride + 1
    slices = []
    for i in range(kh):
        for j in range(kw):
            slices.append(xp[:, i:i + stride * oh:stride, j:j + stride * ow:stride, :])
    patches = jnp.stack(slices, axis=3)                 # (N, OH, OW, KH*KW, C)
    patches = jnp.transpose(patches, (0, 1, 2, 4, 3))   # (N, OH, OW, C, KH*KW)
    return patches.reshape(n * oh * ow, c * kh * kw), (n, oh, ow)


def cnn_block_forward(x_nchw, weight_oihw, gamma, beta, *, stride=1, padding=1):
    """CNNBlock forward. x: (N, C_in, H, W) f32 -> (N, C_out, OH, OW) f32."""
    c_out, c_in, kh, kw = weight_oihw.shape

    # TODO(synk): keep activations NHWC end-to-end at the model boundary to drop this
    # transpose pair (each full-tensor transpose is an extra HBM round-trip).
    x_nhwc = jnp.transpose(x_nchw, (0, 2, 3, 1)).astype(jnp.bfloat16)  # bf16 BEFORE im2col

    # TODO(synk): build the patch tile in-kernel from the padded NHWC input to eliminate
    # the KH*KW im2col blow-up in HBM; interim mitigation is bf16 patches + input fusion.
    patches, (n, oh, ow) = im2col_nhwc(x_nhwc, kh, kw, stride, padding)
    m, k = patches.shape

    # ---------------- Lane-dense, MXU-friendly tile plan ----------------
    m128 = _round_up(m, 128)
    tm = min(512, m128)
    if m128 >= 256 and m128 // tm < 2:
        # Keep >=2 parallel M tiles so v7x's two TensorCores both get work.
        tm = _round_up(m128 // 2, 128)
    m_pad = _round_up(m, tm)

    tk = min(512, _round_up(k, 128))
    k_pad = _round_up(k, tk)

    if _round_up(c_out, 128) <= 512:
        c_pad = _round_up(c_out, 128)
        tn = c_pad                     # n_tiles = 1: patch tiles streamed from HBM once
    else:
        tn = 512                       # 256-multiple keeps v6e/v7x MXUs full
        c_pad = _round_up(c_out, tn)

    m_tiles, n_tiles, k_tiles = m_pad // tm, c_pad // tn, k_pad // tk

    # VMEM budget: ~75% of physical per-core VMEM, capped at 96 MiB.
    # v5e/v6e (128 MiB) -> 96 MiB, v7x (64 MiB) -> 48 MiB; tiles stay well under it,
    # so double-buffering is never dropped.
    try:
        vmem_cap = int(pltpu.get_tpu_info().vmem_capacity_bytes)
    except Exception:  # pragma: no cover - conservative fallback (v7x-sized)
        vmem_cap = 64 * 1024 * 1024
    vmem_limit = min(vmem_cap * 3 // 4, 96 * 1024 * 1024)

    # Zero padding keeps both the matmul and the batch statistics exact
    # (padded rows/columns contribute exactly zero).
    p_pad = jnp.pad(patches, ((0, m_pad - m), (0, k_pad - k)))
    w_mat = weight_oihw.reshape(c_out, c_in * kh * kw).T.astype(jnp.bfloat16)  # (K, C_out)
    w_pad = jnp.pad(w_mat, ((0, k_pad - k), (0, c_pad - c_out)))

    # ---------------- Phase 1: matmul + per-tile channel stats ----------------
    y_pad, stats = pl.pallas_call(
        conv_stats_kernel,
        out_shape=(
            jax.ShapeDtypeStruct((m_pad, c_pad), jnp.bfloat16),
            jax.ShapeDtypeStruct((m_tiles * STAT_ROWS, c_pad), jnp.float32),
        ),
        grid_spec=pltpu.PrefetchScalarGridSpec(
            num_scalar_prefetch=0,
            grid=(m_tiles, n_tiles, k_tiles),
            in_specs=[
                pl.BlockSpec((tm, tk), lambda i, j, kk: (i, kk)),
                pl.BlockSpec((tk, tn), lambda i, j, kk: (kk, j)),
            ],
            out_specs=(
                pl.BlockSpec((tm, tn), lambda i, j, kk: (i, j)),
                pl.BlockSpec((STAT_ROWS, tn), lambda i, j, kk: (i, j)),
            ),
            scratch_shapes=[pltpu.VMEM((tm, tn), jnp.float32)],
        ),
        compiler_params=pltpu.CompilerParams(
            dimension_semantics=("parallel", "parallel", "arbitrary"),
            vmem_limit_bytes=vmem_limit,
            allow_input_fusion=[True, True],  # let XLA fuse the pad/cast producers in
        ),
    )(p_pad, w_pad)

    # ---------------- Tiny combine: exact batch stats + folded scale/shift ----------------
    total_sum = jnp.sum(stats[0::STAT_ROWS], axis=0)     # (c_pad,)
    total_ssq = jnp.sum(stats[1::STAT_ROWS], axis=0)     # (c_pad,)
    mean = total_sum / m                                  # exact: padded rows contribute zero
    # TODO(synk): E[y^2] - mean^2 can cancel for large activation offsets; switch to a
    # centered / Welford-style tile combine if that regime matters.
    var = jnp.maximum(total_ssq / m - mean * mean, 0.0)
    inv_std = jax.lax.rsqrt(var + EPS)
    gamma_pad = jnp.pad(gamma.astype(jnp.float32), (0, c_pad - c_out))
    beta_pad = jnp.pad(beta.astype(jnp.float32), (0, c_pad - c_out))
    scale = (gamma_pad * inv_std).reshape(1, c_pad)
    shift = (beta_pad - mean * gamma_pad * inv_std).reshape(1, c_pad)

    # ---------------- Phase 2: fused BN + LeakyReLU (pure HBM roofline) ----------------
    # Full channel width (lane-dense stores); grow the M tile up to ~24 MiB of
    # double-buffered live VMEM while keeping >=2 grid tiles for megacore.
    def _p2_bytes(t):
        return 2 * t * c_pad * (2 + 4)   # double-buffered bf16 in + f32 out

    tm2 = tm
    while (m_pad % (tm2 * 2) == 0 and m_pad // (tm2 * 2) >= 2
           and _p2_bytes(tm2 * 2) <= 24 * 1024 * 1024):
        tm2 *= 2
    m2_tiles = m_pad // tm2

    out_pad = pl.pallas_call(
        bn_act_kernel,
        out_shape=jax.ShapeDtypeStruct((m_pad, c_pad), jnp.float32),
        grid_spec=pltpu.PrefetchScalarGridSpec(
            num_scalar_prefetch=0,
            grid=(m2_tiles,),
            in_specs=[
                pl.BlockSpec((tm2, c_pad), lambda i: (i, 0)),
                pl.BlockSpec((1, c_pad), lambda i: (0, 0)),
                pl.BlockSpec((1, c_pad), lambda i: (0, 0)),
            ],
            out_specs=pl.BlockSpec((tm2, c_pad), lambda i: (i, 0)),
        ),
        compiler_params=pltpu.CompilerParams(
            dimension_semantics=("parallel",),
            vmem_limit_bytes=vmem_limit,
        ),
    )(y_pad, scale, shift)

    out = out_pad[:m, :c_out].reshape(n, oh, ow, c_out)
    return jnp.transpose(out, (0, 3, 1, 2)).astype(x_nchw.dtype)


def reference_forward(x_nchw, weight_oihw, gamma, beta, *, stride=1, padding=1,
                      conv_dtype=jnp.float32):
    """Pure-JAX reference: conv + training-mode BN + LeakyReLU."""
    y = jax.lax.conv_general_dilated(
        x_nchw.astype(conv_dtype), weight_oihw.astype(conv_dtype),
        window_strides=(stride, stride),
        padding=[(padding, padding), (padding, padding)],
        dimension_numbers=("NCHW", "OIHW", "NCHW"),
        preferred_element_type=jnp.float32)
    mean = jnp.mean(y, axis=(0, 2, 3), keepdims=True)
    var = jnp.mean((y - mean) ** 2, axis=(0, 2, 3), keepdims=True)
    y_hat = (y - mean) / jnp.sqrt(var + EPS)
    z = y_hat * gamma.reshape(1, -1, 1, 1) + beta.reshape(1, -1, 1, 1)
    return jnp.where(z > 0, z, NEG_SLOPE * z)


if __name__ == "__main__":
    key = jax.random.PRNGKey(0)
    k_x, k_w, k_g, k_b = jax.random.split(key, 4)

    # CNNBlock(in_channels=4, out_channels=8, kernel_size=3, stride=1, padding=1)
    N, C_IN, H, W = 2, 4, 16, 16
    C_OUT, KH, KW = 8, 3, 3

    x = jax.random.normal(k_x, (N, C_IN, H, W), dtype=jnp.float32)
    weight = 0.1 * jax.random.normal(k_w, (C_OUT, C_IN, KH, KW), dtype=jnp.float32)
    gamma = 1.0 + 0.1 * jax.random.normal(k_g, (C_OUT,), dtype=jnp.float32)
    beta = 0.05 * jax.random.normal(k_b, (C_OUT,), dtype=jnp.float32)

    fwd = jax.jit(functools.partial(cnn_block_forward, stride=1, padding=1))
    out = jax.block_until_ready(fwd(x, weight, gamma, beta))
    assert out.shape == (N, C_OUT, H, W), out.shape

    # Check vs. a reference using the same bf16 conv operands (validates structure).
    # Tolerance accounts for the bf16 intermediate y (~1 bf16 ulp * gamma/std on z).
    ref_bf16 = reference_forward(x, weight, gamma, beta, conv_dtype=jnp.bfloat16)
    err_matched = float(jnp.max(jnp.abs(out - ref_bf16)))
    assert err_matched < 3e-2, err_matched

    # Looser check vs. the full-f32 reference (bf16 MXU operands + bf16 y intermediate,
    # f32 accumulation and f32 batch statistics).
    ref_f32 = reference_forward(x, weight, gamma, beta)
    err_f32 = float(jnp.max(jnp.abs(out - ref_f32)))
    assert err_f32 < 5e-2, err_f32

    print("KERNEL_OK")
</pallas_src>

<mosaic_0001>
module attributes {stable_mosaic.version = 11 : i64} {
  func.func @conv_stats_kernel(%arg0: i32, %arg1: i32, %arg2: i32, %arg3: memref<256x128xbf16, #tpu.memory_space<vmem>>, %arg4: memref<128x128xbf16, #tpu.memory_space<vmem>>, %arg5: memref<256x128xbf16, #tpu.memory_space<vmem>>, %arg6: memref<8x128xf32, #tpu.memory_space<vmem>>, %arg7: memref<256x128xf32, #tpu.memory_space<vmem>>) attributes {dimension_semantics = [#tpu.dimension_semantics<parallel>, #tpu.dimension_semantics<parallel>, #tpu.dimension_semantics<arbitrary>], iteration_bounds = array<i64: 2, 1, 1>, scalar_prefetch = 0 : i64, scratch_operands = 1 : i64, tpu.core_type = #tpu.core_type<tc>, window_params = [{transform_indices = @transform_0, window_bounds = array<i64: 256, 128>}, {transform_indices = @transform_1, window_bounds = array<i64: 128, 128>}, {transform_indices = @transform_2, window_bounds = array<i64: 256, 128>}, {transform_indices = @transform_3, window_bounds = array<i64: 8, 128>}]} {
    %c0_i32 = arith.constant 0 : i32
    %0 = arith.cmpi eq, %arg2, %c0_i32 : i32
    %1 = arith.extui %0 : i1 to i32
    %c0_i32_0 = arith.constant 0 : i32
    %2 = arith.cmpi ne, %1, %c0_i32_0 : i32
    scf.if %2 {
      %cst_10 = arith.constant 0.000000e+00 : f32
      %12 = vector.broadcast %cst_10 : f32 to vector<256x128xf32>
      %c0_11 = arith.constant 0 : index
      %c0_12 = arith.constant 0 : index
      %13 = vector.load %arg7[%c0_11, %c0_12] : memref<256x128xf32, #tpu.memory_space<vmem>>, vector<256x128xf32>
      tpu.vector_store %arg7[%c0_11, %c0_12], %12 {strides = array<i32>} : memref<256x128xf32, #tpu.memory_space<vmem>>, vector<256x128xf32>,
    } else {
    }
    %c0 = arith.constant 0 : index
    %c0_1 = arith.constant 0 : index
    %3 = vector.load %arg7[%c0, %c0_1] : memref<256x128xf32, #tpu.memory_space<vmem>>, vector<256x128xf32>
    %c0_2 = arith.constant 0 : index
    %c0_3 = arith.constant 0 : index
    %4 = vector.load %arg3[%c0_2, %c0_3] : memref<256x128xbf16, #tpu.memory_space<vmem>>, vector<256x128xbf16>
    %c0_4 = arith.constant 0 : index
    %c0_5 = arith.constant 0 : index
    %5 = vector.load %arg4[%c0_4, %c0_5] : memref<128x128xbf16, #tpu.memory_space<vmem>>, vector<128x128xbf16>
    %cst = arith.constant dense<0.000000e+00> : vector<256x128xf32>
    %6 = tpu.matmul %4, %5, %cst {dimension_numbers = #tpu.dot_dimension_numbers<[1], [0], [0], [1], [0, 0, 1, 1], [], []>} : vector<256x128xbf16>, vector<128x128xbf16>, vector<256x128xf32> -> vector<256x128xf32>
    %7 = arith.addf %3, %6 : vector<256x128xf32>
    %c0_6 = arith.constant 0 : index
    %c0_7 = arith.constant 0 : index
    %8 = vector.load %arg7[%c0_6, %c0_7] : memref<256x128xf32, #tpu.memory_space<vmem>>, vector<256x128xf32>
    tpu.vector_store %arg7[%c0_6, %c0_7], %7 {strides = array<i32>} : memref<256x128xf32, #tpu.memory_space<vmem>>, vector<256x128xf32>,
    %c0_i32_8 = arith.constant 0 : i32
    %9 = arith.cmpi eq, %arg2, %c0_i32_8 : i32
    %10 = arith.extui %9 : i1 to i32
    %c0_i32_9 = arith.constant 0 : i32
    %11 = arith.cmpi ne, %10, %c0_i32_9 : i32
    scf.if %11 {
      %c0_10 = arith.constant 0 : index
      %c0_11 = arith.constant 0 : index
      %12 = vector.load %arg7[%c0_10, %c0_11] : memref<256x128xf32, #tpu.memory_space<vmem>>, vector<256x128xf32>
      %13 = arith.truncf %12 : vector<256x128xf32> to vector<256x128xbf16>
      %c0_12 = arith.constant 0 : index
      %c0_13 = arith.constant 0 : index
      %14 = vector.load %arg5[%c0_12, %c0_13] : memref<256x128xbf16, #tpu.memory_space<vmem>>, vector<256x128xbf16>
      tpu.vector_store %arg5[%c0_12, %c0_13], %13 {strides = array<i32>} : memref<256x128xbf16, #tpu.memory_space<vmem>>, vector<256x128xbf16>,
      %cst_14 = arith.constant dense<0.000000e+00> : vector<128xf32>
      %15 = vector.multi_reduction <add>, %12, %cst_14 [0] : vector<256x128xf32> to vector<128xf32>
      %16 = vector.shape_cast %15 : vector<128xf32> to vector<1x128xf32>
      %17 = arith.mulf %12, %12 : vector<256x128xf32>
      %cst_15 = arith.constant dense<0.000000e+00> : vector<128xf32>
      %18 = vector.multi_reduction <add>, %17, %cst_15 [0] : vector<256x128xf32> to vector<128xf32>
      %19 = vector.shape_cast %18 : vector<128xf32> to vector<1x128xf32>
      %20 = tpu.iota {dimensions = array<i32: 0>} : vector<8x128xi32>
      %c0_i32_16 = arith.constant 0 : i32
      %21 = vector.broadcast %c0_i32_16 : i32 to vector<8x128xi32>
      %22 = arith.cmpi eq, %20, %21 : vector<8x128xi32>
      %23 = vector.shape_cast %16 : vector<1x128xf32> to vector<1x128xf32>
      %24 = vector.broadcast %23 : vector<1x128xf32> to vector<8x128xf32>
      %c1_i32 = arith.constant 1 : i32
      %25 = vector.broadcast %c1_i32 : i32 to vector<8x128xi32>
      %26 = arith.cmpi eq, %20, %25 : vector<8x128xi32>
      %27 = vector.shape_cast %19 : vector<1x128xf32> to vector<1x128xf32>
      %28 = vector.broadcast %27 : vector<1x128xf32> to vector<8x128xf32>
      %cst_17 = arith.constant 0.000000e+00 : f32
      %29 = vector.broadcast %cst_17 : f32 to vector<8x128xf32>
      %30 = arith.select %26, %28, %29 : vector<8x128xi1>, vector<8x128xf32>
      %31 = arith.select %22, %24, %30 : vector<8x128xi1>, vector<8x128xf32>
      %c0_18 = arith.constant 0 : index
      %c0_19 = arith.constant 0 : index
      %32 = vector.load %arg6[%c0_18, %c0_19] : memref<8x128xf32, #tpu.memory_space<vmem>>, vector<8x128xf32>
      tpu.vector_store %arg6[%c0_18, %c0_19], %31 {strides = array<i32>} : memref<8x128xf32, #tpu.memory_space<vmem>>, vector<8x128xf32>,
    } else {
    }
    return
  }
  func.func @transform_0(%arg0: i32, %arg1: i32, %arg2: i32) -> (i32, i32) {
    %c0_i32 = arith.constant 0 : i32
    return %arg0, %arg2 : i32, i32
  }
  func.func @transform_1(%arg0: i32, %arg1: i32, %arg2: i32) -> (i32, i32) {
    %c0_i32 = arith.constant 0 : i32
    return %arg2, %arg1 : i32, i32
  }
  func.func @transform_2(%arg0: i32, %arg1: i32, %arg2: i32) -> (i32, i32) {
    %c0_i32 = arith.constant 0 : i32
    return %arg0, %arg1 : i32, i32
  }
  func.func @transform_3(%arg0: i32, %arg1: i32, %arg2: i32) -> (i32, i32) {
    %c0_i32 = arith.constant 0 : i32
    return %arg0, %arg1 : i32, i32
  }
}

module attributes {stable_mosaic.version = 11 : i64} {
  func.func @bn_act_kernel(%arg0: i32, %arg1: memref<256x128xbf16, #tpu.memory_space<vmem>>, %arg2: memref<1x128xf32, #tpu.memory_space<vmem>>, %arg3: memref<1x128xf32, #tpu.memory_space<vmem>>, %arg4: memref<256x128xf32, #tpu.memory_space<vmem>>) attributes {dimension_semantics = [#tpu.dimension_semantics<parallel>], iteration_bounds = array<i64: 2>, scalar_prefetch = 0 : i64, scratch_operands = 0 : i64, tpu.core_type = #tpu.core_type<tc>, window_params = [{transform_indices = @transform_0, window_bounds = array<i64: 256, 128>}, {pipeline_mode = #tpu.pipeline_mode<synchronous>, transform_indices = @transform_1, window_bounds = array<i64: 1, 128>}, {pipeline_mode = #tpu.pipeline_mode<synchronous>, transform_indices = @transform_2, window_bounds = array<i64: 1, 128>}, {transform_indices = @transform_3, window_bounds = array<i64: 256, 128>}]} {
    %c0 = arith.constant 0 : index
    %c0_0 = arith.constant 0 : index
    %0 = vector.load %arg1[%c0, %c0_0] : memref<256x128xbf16, #tpu.memory_space<vmem>>, vector<256x128xbf16>
    %1 = arith.extf %0 : vector<256x128xbf16> to vector<256x128xf32>
    %c0_1 = arith.constant 0 : index
    %c0_2 = arith.constant 0 : index
    %2 = vector.load %arg2[%c0_1, %c0_2] : memref<1x128xf32, #tpu.memory_space<vmem>>, vector<1x128xf32>
    %3 = vector.broadcast %2 : vector<1x128xf32> to vector<256x128xf32>
    %4 = arith.mulf %1, %3 : vector<256x128xf32>
    %c0_3 = arith.constant 0 : index
    %c0_4 = arith.constant 0 : index
    %5 = vector.load %arg3[%c0_3, %c0_4] : memref<1x128xf32, #tpu.memory_space<vmem>>, vector<1x128xf32>
    %6 = vector.broadcast %5 : vector<1x128xf32> to vector<256x128xf32>
    %7 = arith.addf %4, %6 : vector<256x128xf32>
    %cst = arith.constant 0.000000e+00 : f32
    %8 = vector.broadcast %cst : f32 to vector<256x128xf32>
    %9 = arith.cmpf ogt, %7, %8 : vector<256x128xf32>
    %cst_5 = arith.constant 1.000000e-01 : f32
    %10 = vector.broadcast %cst_5 : f32 to vector<256x128xf32>
    %11 = arith.mulf %10, %7 : vector<256x128xf32>
    %12 = arith.select %9, %7, %11 : vector<256x128xi1>, vector<256x128xf32>
    %c0_6 = arith.constant 0 : index
    %c0_7 = arith.constant 0 : index
    %13 = vector.load %arg4[%c0_6, %c0_7] : memref<256x128xf32, #tpu.memory_space<vmem>>, vector<256x128xf32>
    tpu.vector_store %arg4[%c0_6, %c0_7], %12 {strides = array<i32>} : memref<256x128xf32, #tpu.memory_space<vmem>>, vector<256x128xf32>,
    return
  }
  func.func @transform_0(%arg0: i32) -> (i32, i32) {
    %c0_i32 = arith.constant 0 : i32
    %c0_i32_0 = arith.constant 0 : i32
    return %arg0, %c0_i32 : i32, i32
  }
  func.func @transform_1(%arg0: i32) -> (i32, i32) {
    %c0_i32 = arith.constant 0 : i32
    %c0_i32_0 = arith.constant 0 : i32
    %c0_i32_1 = arith.constant 0 : i32
    return %c0_i32, %c0_i32_0 : i32, i32
  }
  func.func @transform_2(%arg0: i32) -> (i32, i32) {
    %c0_i32 = arith.constant 0 : i32
    %c0_i32_0 = arith.constant 0 : i32
    %c0_i32_1 = arith.constant 0 : i32
    return %c0_i32, %c0_i32_0 : i32, i32
  }
  func.func @transform_3(%arg0: i32) -> (i32, i32) {
    %c0_i32 = arith.constant 0 : i32
    %c0_i32_0 = arith.constant 0 : i32
    return %arg0, %c0_i32 : i32, i32
  }
}

</mosaic_0001>

<llo_original>
// kernel: cnn_block_forward.3
$region0: #{cnn_block_forward.3}
  #allocation0 [shape = 'u32[]', space=smem, size = 0x4, offset = 0x4, fixed_abs, tag = 'smem constant byte address 0x4 - core index']
  #allocation1 [shape = 'u32[144,128]{1,0:T(1,128)}', space=vmem, size = 0x12000, scoped, tag = 'internal scratch']
  %s0 = inlined_call_operand.vmem [shape: bf16[512,128], index: 0, kind: input, shape index: {}]
  %s1 = inlined_call_operand.vmem [shape: f32[1,128], index: 1, kind: input, shape index: {}]
  %s2 = inlined_call_operand.vmem [shape: f32[1,128], index: 2, kind: input, shape index: {}]
  %s3 = inlined_call_operand.vmem [shape: f32[512,128], index: 3, kind: output, shape index: {}]
  %s4 = sld [smem:[#allocation0]]
  $region45: #{cnn_block_forward.3} parent=0
    _
  %s6 = ssub.s32 1, %s4
  %s7 = scalar_select 0, %s6, %s4
  loop: start=0, step=1, limit=4
  $region2: #{cnn_block_forward.3} parent=0 // loop_pre_header
    _
  $region3: #{cnn_block_forward.3} parent=0 // loop_header
    %s9 = sphi 0, %s13
    %p10 = scmp.ge.s32.totalorder %s9, 4
    %s19 = sphi 0, %s21
    %s22 = sphi 0, %s19
    %s23 = sphi 0, %s22
    %s39 = sphi 0, %s23
    %s43 = sphi 0, %s43
    %s45 = sphi 0, %s43
    %s46 = sphi 0, %s45
    %s60 = sphi 0, %s46
    %s64 = sphi 0, %s64
    %s66 = sphi 0, %s64
    %s67 = sphi 0, %s66
    %s81 = sphi 0, %s67
    %s87 = sphi 0, %s89
    %s90 = sphi 0, %s87
    %s91 = sphi 0, %s90
    %s107 = sphi 0, %s91
  $region4: #{cnn_block_forward.3} parent=0 // loop_header_branch
    %12 = sbr.rel (%p10) target = $region8
  $region5: #{cnn_block_forward.3} parent=0 // loop_body
    %s14 = ssub.s32 %s9, 1
    %s15 = ssub.s32 %s9, 2
    %s16 = sadd.s32 %s9, 1
    %s17 = ssub.s32 %s9, %s16
    %p18 = scmp.eq.s32.totalorder %s17, 0
    %s20 = sadd.s32 %s19, 1
    %s21 = scalar_select %p18, %s19, %s20
    %p24 = pneg %p18
    %p25 = scmp.eq.s32.totalorder %s9, 1
    %p26 = por %p24, %p25
    %p27 = scmp.ne.s32.totalorder %s19, %s22
    %p28 = scmp.eq.s32.totalorder %s9, 0
    %p29 = por %p27, %p28
    %p30 = scmp.ne.s32.totalorder %s19, %s22
    %p31 = scmp.eq.s32.totalorder %s14, 1
    %p32 = por %p30, %p31
    %p33 = scmp.ne.s32.totalorder %s22, %s23
    %p34 = scmp.eq.s32.totalorder %s14, 0
    %p35 = por %p33, %p34
    %p36 = scmp.ne.s32.totalorder %s22, %s23
    %p37 = scmp.eq.s32.totalorder %s15, 1
    %p38 = por %p36, %p37
    %p40 = scmp.ne.s32.totalorder %s23, %s39
    %p41 = scmp.eq.s32.totalorder %s15, 0
    %p42 = por %p40, %p41
    %s44 = sadd.s32 %s43, 1
    %p47 = scmp.eq.s32.totalorder %s9, 1
    %p48 = scmp.ne.s32.totalorder %s43, %s45
    %p49 = scmp.eq.s32.totalorder %s9, 0
    %p50 = por %p48, %p49
    %p51 = scmp.ne.s32.totalorder %s43, %s45
    %p52 = scmp.eq.s32.totalorder %s14, 1
    %p53 = por %p51, %p52
    %p54 = scmp.ne.s32.totalorder %s45, %s46
    %p55 = scmp.eq.s32.totalorder %s14, 0
    %p56 = por %p54, %p55
    %p57 = scmp.ne.s32.totalorder %s45, %s46
    %p58 = scmp.eq.s32.totalorder %s15, 1
    %p59 = por %p57, %p58
    %p61 = scmp.ne.s32.totalorder %s46, %s60
    %p62 = scmp.eq.s32.totalorder %s15, 0
    %p63 = por %p61, %p62
    %s65 = sadd.s32 %s64, 1
    %p68 = scmp.eq.s32.totalorder %s9, 1
    %p69 = scmp.ne.s32.totalorder %s64, %s66
    %p70 = scmp.eq.s32.totalorder %s9, 0
    %p71 = por %p69, %p70
    %p72 = scmp.ne.s32.totalorder %s64, %s66
    %p73 = scmp.eq.s32.totalorder %s14, 1
    %p74 = por %p72, %p73
    %p75 = scmp.ne.s32.totalorder %s66, %s67
    %p76 = scmp.eq.s32.totalorder %s14, 0
    %p77 = por %p75, %p76
    %p78 = scmp.ne.s32.totalorder %s66, %s67
    %p79 = scmp.eq.s32.totalorder %s15, 1
    %p80 = por %p78, %p79
    %p82 = scmp.ne.s32.totalorder %s67, %s81
    %p83 = scmp.eq.s32.totalorder %s15, 0
    %p84 = por %p82, %p83
    %s85 = ssub.s32 %s9, %s16
    %p86 = scmp.eq.s32.totalorder %s85, 0
    %s88 = sadd.s32 %s87, 1
    %s89 = scalar_select %p86, %s87, %s88
    %p92 = pneg %p86
    %p93 = scmp.eq.s32.totalorder %s9, 1
    %p94 = por %p92, %p93
    %p95 = scmp.ne.s32.totalorder %s87, %s90
    %p96 = scmp.eq.s32.totalorder %s9, 0
    %p97 = por %p95, %p96
    %p98 = scmp.ne.s32.totalorder %s87, %s90
    %p99 = scmp.eq.s32.totalorder %s14, 1
    %p100 = por %p98, %p99
    %p101 = scmp.ne.s32.totalorder %s90, %s91
    %p102 = scmp.eq.s32.totalorder %s14, 0
    %p103 = por %p101, %p102
    %p104 = scmp.ne.s32.totalorder %s90, %s91
    %p105 = scmp.eq.s32.totalorder %s15, 1
    %p106 = por %p104, %p105
    %p108 = scmp.ne.s32.totalorder %s91, %s107
    %p109 = scmp.eq.s32.totalorder %s15, 0
    %p110 = por %p108, %p109
    %p111 = scmp.le.s32.totalorder 1, %s9
    %p112 = scmp.lt.s32.totalorder %s9, 3
    %p113 = pnand %p111, %p112
    %p114 = pneg %p113
    // Predicated region
    $region9: #{cnn_block_forward.3} parent=5 // pred_check
      _
    $region10: #{cnn_block_forward.3} parent=5 // pred_check_branch
      %116 = sbr.rel (%p113) target = $region12
    $region11: #{cnn_block_forward.3} parent=5 // pred_region
      %s117 = ssub.s32 %s9, 1
      // Predicated region
      $region13: #{cnn_block_forward.3} parent=11 // pred_check
        %p118 = pneg %p56
      $region14: #{cnn_block_forward.3} parent=11 // pred_check_branch
        %120 = sbr.rel (%p118) target = $region16
      $region15: #{cnn_block_forward.3} parent=11 // pred_region
        _
      $region16: #{cnn_block_forward.3} parent=11 // pred_fallthru
        _
      // Predicated region
      $region17: #{cnn_block_forward.3} parent=11 // pred_check
        %p121 = pneg %p77
      $region18: #{cnn_block_forward.3} parent=11 // pred_check_branch
        %123 = sbr.rel (%p121) target = $region20
      $region19: #{cnn_block_forward.3} parent=11 // pred_region
        _
      $region20: #{cnn_block_forward.3} parent=11 // pred_fallthru
        _
    $region12: #{cnn_block_forward.3} parent=5 // pred_fallthru
      _
    %p124 = scmp.lt.s32.totalorder %s9, 2
    // Predicated region
    $region21: #{cnn_block_forward.3} parent=5 // pred_check
      %p125 = pneg %p124
    $region22: #{cnn_block_forward.3} parent=5 // pred_check_branch
      %127 = sbr.rel (%p125) target = $region24
    $region23: #{cnn_block_forward.3} parent=5 // pred_region
      // Predicated region
      $region25: #{cnn_block_forward.3} parent=23 // pred_check
        %p128 = pneg %p29
      $region26: #{cnn_block_forward.3} parent=23 // pred_check_branch
        %130 = sbr.rel (%p128) target = $region28
      $region27: #{cnn_block_forward.3} parent=23 // pred_region
        %s131 = smul.u32 32, %s9
        %p132 = scmp.lt.s32.totalorder %s131, 63
        %s133 = scalar_select %p132, %s131, 63
        %s134 = smul.addr %s133, 4
        %s135 = scalar_lea.vmem %s0, %s134
        %s136 = smul.u32 32, %s9
      $region28: #{cnn_block_forward.3} parent=23 // pred_fallthru
        _
    $region24: #{cnn_block_forward.3} parent=5 // pred_fallthru
      _
    %p137 = scmp.le.s32.totalorder 1, %s9
    %p138 = scmp.lt.s32.totalorder %s9, 3
    %p139 = pnand %p137, %p138
    %p140 = pneg %p139
    // Predicated region
    $region29: #{cnn_block_forward.3} parent=5 // pred_check
      _
    $region30: #{cnn_block_forward.3} parent=5 // pred_check_branch
      %142 = sbr.rel (%p139) target = $region32
    $region31: #{cnn_block_forward.3} parent=5 // pred_region
      %s143 = ssub.s32 %s9, 1
      %s144 = smul.u32 32, %s14
      %p145 = scmp.lt.s32.totalorder %s144, 63
      %s146 = scalar_select %p145, %s144, 63
      %s147 = smul.addr %s146, 4
      %s148 = scalar_lea.vmem %s0, %s147
      %p149 = pneg %p35
      %p150 = pneg %p32
      %p151 = pneg %p56
      %p152 = pneg %p53
      %p153 = pneg %p77
      %p154 = pneg %p74
      %p155 = pneg %p103
      %p156 = pneg %p100
      %s157 = smul.u32 32, %s14
      %p158 = scmp.lt.s32.totalorder %s157, 63
      %s159 = scalar_select %p158, %s157, 63
      %s160 = smul.addr %s159, 8
      %s161 = scalar_lea.vmem %s3, %s160
      %s162 = smul.u32 32, %s14
      %p163 = scmp.lt.s32.totalorder %s162, 63
      %s164 = scalar_select %p163, %s162, 63
      %s165 = smul.addr %s164, 4
      %s166 = scalar_lea.vmem %s0, %s165
      %s167 = smul.u32 32, %s14
      %s168 = smul.u32 32, %s14
      %p169 = scmp.lt.s32.totalorder %s168, 63
      %s170 = scalar_select %p169, %s168, 63
      %s171 = smul.addr %s170, 8
      %s172 = scalar_lea.vmem %s3, %s171
      %s173 = smul.u32 32, %s14
      %v174 = vld [vmem:[%s166] sm:$0xf]
      %v175 = vld [vmem:[%s166 + $0x4] sm:$0xf]
      %v176 = vld [vmem:[%s166 + $0x8] sm:$0xf]
      %v177 = vld [vmem:[%s166 + $0xc] sm:$0xf]
      %v178 = vld [vmem:[%s166 + $0x10] sm:$0xf]
      %v179 = vld [vmem:[%s166 + $0x14] sm:$0xf]
      %v180 = vld [vmem:[%s166 + $0x18] sm:$0xf]
      %v181 = vld [vmem:[%s166 + $0x1c] sm:$0xf]
      %v182 = vld [vmem:[%s166 + $0x20] sm:$0xf]
      %v183 = vld [vmem:[%s166 + $0x24] sm:$0xf]
      %v184 = vld [vmem:[%s166 + $0x28] sm:$0xf]
      %v185 = vld [vmem:[%s166 + $0x2c] sm:$0xf]
      %v186 = vld [vmem:[%s166 + $0x30] sm:$0xf]
      %v187 = vld [vmem:[%s166 + $0x34] sm:$0xf]
      %v188 = vld [vmem:[%s166 + $0x38] sm:$0xf]
      %v189 = vld [vmem:[%s166 + $0x3c] sm:$0xf]
      %v190 = vld [vmem:[%s166 + $0x40] sm:$0xf]
      %v191 = vld [vmem:[%s166 + $0x44] sm:$0xf]
      %v192 = vld [vmem:[%s166 + $0x48] sm:$0xf]
      %v193 = vld [vmem:[%s166 + $0x4c] sm:$0xf]
      %v194 = vld [vmem:[%s166 + $0x50] sm:$0xf]
      %v195 = vld [vmem:[%s166 + $0x54] sm:$0xf]
      %v196 = vld [vmem:[%s166 + $0x58] sm:$0xf]
      %v197 = vld [vmem:[%s166 + $0x5c] sm:$0xf]
      %v198 = vld [vmem:[%s166 + $0x60] sm:$0xf]
      %v199 = vld [vmem:[%s166 + $0x64] sm:$0xf]
      %v200 = vld [vmem:[%s166 + $0x68] sm:$0xf]
      %v201 = vld [vmem:[%s166 + $0x6c] sm:$0xf]
      %v202 = vld [vmem:[%s166 + $0x70] sm:$0xf]
      %v203 = vld [vmem:[%s166 + $0x74] sm:$0xf]
      %v204 = vld [vmem:[%s166 + $0x78] sm:$0xf]
      %v205 = vld [vmem:[%s166 + $0x7c] sm:$0xf]
      %v206 = vunpack.c.l.bf16 %v174
      %v207 = vunpack.c.l.bf16 %v175
      %v208 = vunpack.c.l.bf16 %v176
      %v209 = vunpack.c.l.bf16 %v177
      %v210 = vunpack.c.l.bf16 %v178
      %v211 = vunpack.c.l.bf16 %v179
      %v212 = vunpack.c.l.bf16 %v180
      %v213 = vunpack.c.l.bf16 %v181
      %v214 = vunpack.c.l.bf16 %v182
      %v215 = vunpack.c.l.bf16 %v183
      %v216 = vunpack.c.l.bf16 %v184
      %v217 = vunpack.c.l.bf16 %v185
      %v218 = vunpack.c.l.bf16 %v186
      %v219 = vunpack.c.l.bf16 %v187
      %v220 = vunpack.c.l.bf16 %v188
      %v221 = vunpack.c.l.bf16 %v189
      %v222 = vunpack.c.l.bf16 %v190
      %v223 = vunpack.c.l.bf16 %v191
      %v224 = vunpack.c.l.bf16 %v192
      %v225 = vunpack.c.l.bf16 %v193
      %v226 = vunpack.c.l.bf16 %v194
      %v227 = vunpack.c.l.bf16 %v195
      %v228 = vunpack.c.l.bf16 %v196
      %v229 = vunpack.c.l.bf16 %v197
      %v230 = vunpack.c.l.bf16 %v198
      %v231 = vunpack.c.l.bf16 %v199
      %v232 = vunpack.c.l.bf16 %v200
      %v233 = vunpack.c.l.bf16 %v201
      %v234 = vunpack.c.l.bf16 %v202
      %v235 = vunpack.c.l.bf16 %v203
      %v236 = vunpack.c.l.bf16 %v204
      %v237 = vunpack.c.l.bf16 %v205
      %v238 = vld [vmem:[%s1] sm:$0x1]
      %v240 = vlaneseq
      %v241 = vshrl.u32 %v240, 7
      %v242 = vsub.s32 0, %v241
      %v243 = vrot.slane %v238, %v242
      %v245 = vmul.f32 %v206, %v243
      %v246 = vmul.f32 %v207, %v243
      %v247 = vmul.f32 %v208, %v243
      %v248 = vmul.f32 %v209, %v243
      %v249 = vmul.f32 %v210, %v243
      %v250 = vmul.f32 %v211, %v243
      %v251 = vmul.f32 %v212, %v243
      %v252 = vmul.f32 %v213, %v243
      %v253 = vmul.f32 %v214, %v243
      %v254 = vmul.f32 %v215, %v243
      %v255 = vmul.f32 %v216, %v243
      %v256 = vmul.f32 %v217, %v243
      %v257 = vmul.f32 %v218, %v243
      %v258 = vmul.f32 %v219, %v243
      %v259 = vmul.f32 %v220, %v243
      %v260 = vmul.f32 %v221, %v243
      %v261 = vmul.f32 %v222, %v243
      %v262 = vmul.f32 %v223, %v243
      %v263 = vmul.f32 %v224, %v243
      %v264 = vmul.f32 %v225, %v243
      %v265 = vmul.f32 %v226, %v243
      %v266 = vmul.f32 %v227, %v243
      %v267 = vmul.f32 %v228, %v243
      %v268 = vmul.f32 %v229, %v243
      %v269 = vmul.f32 %v230, %v243
      %v270 = vmul.f32 %v231, %v243
      %v271 = vmul.f32 %v232, %v243
      %v272 = vmul.f32 %v233, %v243
      %v273 = vmul.f32 %v234, %v243
      %v274 = vmul.f32 %v235, %v243
      %v275 = vmul.f32 %v236, %v243
      %v276 = vmul.f32 %v237, %v243
      %v277 = vld [vmem:[%s2] sm:$0x1]
      %v279 = vlaneseq
      %v280 = vshrl.u32 %v279, 7
      %v281 = vsub.s32 0, %v280
      %v282 = vrot.slane %v277, %v281
      %v284 = vadd.f32 %v245, %v282
      %v285 = vadd.f32 %v246, %v282
      %v286 = vadd.f32 %v247, %v282
      %v287 = vadd.f32 %v248, %v282
      %v288 = vadd.f32 %v249, %v282
      %v289 = vadd.f32 %v250, %v282
      %v290 = vadd.f32 %v251, %v282
      %v291 = vadd.f32 %v252, %v282
      %v292 = vadd.f32 %v253, %v282
      %v293 = vadd.f32 %v254, %v282
      %v294 = vadd.f32 %v255, %v282
      %v295 = vadd.f32 %v256, %v282
      %v296 = vadd.f32 %v257, %v282
      %v297 = vadd.f32 %v258, %v282
      %v298 = vadd.f32 %v259, %v282
      %v299 = vadd.f32 %v260, %v282
      %v300 = vadd.f32 %v261, %v282
      %v301 = vadd.f32 %v262, %v282
      %v302 = vadd.f32 %v263, %v282
      %v303 = vadd.f32 %v264, %v282
      %v304 = vadd.f32 %v265, %v282
      %v305 = vadd.f32 %v266, %v282
      %v306 = vadd.f32 %v267, %v282
      %v307 = vadd.f32 %v268, %v282
      %v308 = vadd.f32 %v269, %v282
      %v309 = vadd.f32 %v270, %v282
      %v310 = vadd.f32 %v271, %v282
      %v311 = vadd.f32 %v272, %v282
      %v312 = vadd.f32 %v273, %v282
      %v313 = vadd.f32 %v274, %v282
      %v314 = vadd.f32 %v275, %v282
      %v315 = vadd.f32 %v276, %v282
      %vm316 = vcmp.gt.f32.partialorder %v284, 0.0
      %vm317 = vcmp.gt.f32.partialorder %v285, 0.0
      %vm318 = vcmp.gt.f32.partialorder %v286, 0.0
      %vm319 = vcmp.gt.f32.partialorder %v287, 0.0
      %vm320 = vcmp.gt.f32.partialorder %v288, 0.0
      %vm321 = vcmp.gt.f32.partialorder %v289, 0.0
      %vm322 = vcmp.gt.f32.partialorder %v290, 0.0
      %vm323 = vcmp.gt.f32.partialorder %v291, 0.0
      %vm324 = vcmp.gt.f32.partialorder %v292, 0.0
      %vm325 = vcmp.gt.f32.partialorder %v293, 0.0
      %vm326 = vcmp.gt.f32.partialorder %v294, 0.0
      %vm327 = vcmp.gt.f32.partialorder %v295, 0.0
      %vm328 = vcmp.gt.f32.partialorder %v296, 0.0
      %vm329 = vcmp.gt.f32.partialorder %v297, 0.0
      %vm330 = vcmp.gt.f32.partialorder %v298, 0.0
      %vm331 = vcmp.gt.f32.partialorder %v299, 0.0
      %vm332 = vcmp.gt.f32.partialorder %v300, 0.0
      %vm333 = vcmp.gt.f32.partialorder %v301, 0.0
      %vm334 = vcmp.gt.f32.partialorder %v302, 0.0
      %vm335 = vcmp.gt.f32.partialorder %v303, 0.0
      %vm336 = vcmp.gt.f32.partialorder %v304, 0.0
      %vm337 = vcmp.gt.f32.partialorder %v305, 0.0
      %vm338 = vcmp.gt.f32.partialorder %v306, 0.0
      %vm339 = vcmp.gt.f32.partialorder %v307, 0.0
      %vm340 = vcmp.gt.f32.partialorder %v308, 0.0
      %vm341 = vcmp.gt.f32.partialorder %v309, 0.0
      %vm342 = vcmp.gt.f32.partialorder %v310, 0.0
      %vm343 = vcmp.gt.f32.partialorder %v311, 0.0
      %vm344 = vcmp.gt.f32.partialorder %v312, 0.0
      %vm345 = vcmp.gt.f32.partialorder %v313, 0.0
      %vm346 = vcmp.gt.f32.partialorder %v314, 0.0
      %vm347 = vcmp.gt.f32.partialorder %v315, 0.0
      %v348 = vmul.f32 %v284, 0.1
      %v349 = vmul.f32 %v285, 0.1
      %v350 = vmul.f32 %v286, 0.1
      %v351 = vmul.f32 %v287, 0.1
      %v352 = vmul.f32 %v288, 0.1
      %v353 = vmul.f32 %v289, 0.1
      %v354 = vmul.f32 %v290, 0.1
      %v355 = vmul.f32 %v291, 0.1
      %v356 = vmul.f32 %v292, 0.1
      %v357 = vmul.f32 %v293, 0.1
      %v358 = vmul.f32 %v294, 0.1
      %v359 = vmul.f32 %v295, 0.1
      %v360 = vmul.f32 %v296, 0.1
      %v361 = vmul.f32 %v297, 0.1
      %v362 = vmul.f32 %v298, 0.1
      %v363 = vmul.f32 %v299, 0.1
      %v364 = vmul.f32 %v300, 0.1
      %v365 = vmul.f32 %v301, 0.1
      %v366 = vmul.f32 %v302, 0.1
      %v367 = vmul.f32 %v303, 0.1
      %v368 = vmul.f32 %v304, 0.1
      %v369 = vmul.f32 %v305, 0.1
      %v370 = vmul.f32 %v306, 0.1
      %v371 = vmul.f32 %v307, 0.1
      %v372 = vmul.f32 %v308, 0.1
      %v373 = vmul.f32 %v309, 0.1
      %v374 = vmul.f32 %v310, 0.1
      %v375 = vmul.f32 %v311, 0.1
      %v376 = vmul.f32 %v312, 0.1
      %v377 = vmul.f32 %v313, 0.1
      %v378 = vmul.f32 %v314, 0.1
      %v379 = vmul.f32 %v315, 0.1
      %v380 = vsel %vm316, %v284, %v348
      %v381 = vsel %vm317, %v285, %v349
      %v382 = vsel %vm318, %v286, %v350
      %v383 = vsel %vm319, %v287, %v351
      %v384 = vsel %vm320, %v288, %v352
      %v385 = vsel %vm321, %v289, %v353
      %v386 = vsel %vm322, %v290, %v354
      %v387 = vsel %vm323, %v291, %v355
      %v388 = vsel %vm324, %v292, %v356
      %v389 = vsel %vm325, %v293, %v357
      %v390 = vsel %vm326, %v294, %v358
      %v391 = vsel %vm327, %v295, %v359
      %v392 = vsel %vm328, %v296, %v360
      %v393 = vsel %vm329, %v297, %v361
      %v394 = vsel %vm330, %v298, %v362
      %v395 = vsel %vm331, %v299, %v363
      %v396 = vsel %vm332, %v300, %v364
      %v397 = vsel %vm333, %v301, %v365
      %v398 = vsel %vm334, %v302, %v366
      %v399 = vsel %vm335, %v303, %v367
      %v400 = vsel %vm336, %v304, %v368
      %v401 = vsel %vm337, %v305, %v369
      %v402 = vsel %vm338, %v306, %v370
      %v403 = vsel %vm339, %v307, %v371
      %v404 = vsel %vm340, %v308, %v372
      %v405 = vsel %vm341, %v309, %v373
      %v406 = vsel %vm342, %v310, %v374
      %v407 = vsel %vm343, %v311, %v375
      %v408 = vsel %vm344, %v312, %v376
      %v409 = vsel %vm345, %v313, %v377
      %v410 = vsel %vm346, %v314, %v378
      %v411 = vsel %vm347, %v315, %v379
      %412 = vst [vmem:[%s172] sm:$0xff] %v380
      %413 = vst [vmem:[%s172 + $0x8] sm:$0xff] %v381
      %414 = vst [vmem:[%s172 + $0x10] sm:$0xff] %v382
      %415 = vst [vmem:[%s172 + $0x18] sm:$0xff] %v383
      %416 = vst [vmem:[%s172 + $0x20] sm:$0xff] %v384
      %417 = vst [vmem:[%s172 + $0x28] sm:$0xff] %v385
      %418 = vst [vmem:[%s172 + $0x30] sm:$0xff] %v386
      %419 = vst [vmem:[%s172 + $0x38] sm:$0xff] %v387
      %420 = vst [vmem:[%s172 + $0x40] sm:$0xff] %v388
      %421 = vst [vmem:[%s172 + $0x48] sm:$0xff] %v389
      %422 = vst [vmem:[%s172 + $0x50] sm:$0xff] %v390
      %423 = vst [vmem:[%s172 + $0x58] sm:$0xff] %v391
      %424 = vst [vmem:[%s172 + $0x60] sm:$0xff] %v392
      %425 = vst [vmem:[%s172 + $0x68] sm:$0xff] %v393
      %426 = vst [vmem:[%s172 + $0x70] sm:$0xff] %v394
      %427 = vst [vmem:[%s172 + $0x78] sm:$0xff] %v395
      %428 = vst [vmem:[%s172 + $0x80] sm:$0xff] %v396
      %429 = vst [vmem:[%s172 + $0x88] sm:$0xff] %v397
      %430 = vst [vmem:[%s172 + $0x90] sm:$0xff] %v398
      %431 = vst [vmem:[%s172 + $0x98] sm:$0xff] %v399
      %432 = vst [vmem:[%s172 + $0xa0] sm:$0xff] %v400
      %433 = vst [vmem:[%s172 + $0xa8] sm:$0xff] %v401
      %434 = vst [vmem:[%s172 + $0xb0] sm:$0xff] %v402
      %435 = vst [vmem:[%s172 + $0xb8] sm:$0xff] %v403
      %436 = vst [vmem:[%s172 + $0xc0] sm:$0xff] %v404
      %437 = vst [vmem:[%s172 + $0xc8] sm:$0xff] %v405
      %438 = vst [vmem:[%s172 + $0xd0] sm:$0xff] %v406
      %439 = vst [vmem:[%s172 + $0xd8] sm:$0xff] %v407
      %440 = vst [vmem:[%s172 + $0xe0] sm:$0xff] %v408
      %441 = vst [vmem:[%s172 + $0xe8] sm:$0xff] %v409
      %442 = vst [vmem:[%s172 + $0xf0] sm:$0xff] %v410
      %443 = vst [vmem:[%s172 + $0xf8] sm:$0xff] %v411
      %s444 = smul.u32 32, %s14
      %p445 = scmp.lt.s32.totalorder %s444, 63
      %s446 = scalar_select %p445, %s444, 63
      %s447 = smul.addr %s446, 8
      %s448 = scalar_lea.vmem %s3, %s447
      // Predicated region
      $region33: #{cnn_block_forward.3} parent=31 // pred_check
        %p449 = pneg %p100
      $region34: #{cnn_block_forward.3} parent=31 // pred_check_branch
        %451 = sbr.rel (%p449) target = $region36
      $region35: #{cnn_block_forward.3} parent=31 // pred_region
        %s452 = smul.u32 32, %s14
      $region36: #{cnn_block_forward.3} parent=31 // pred_fallthru
        _
    $region32: #{cnn_block_forward.3} parent=5 // pred_fallthru
      _
    %p453 = scmp.le.s32.totalorder 2, %s9
    // Predicated region
    $region37: #{cnn_block_forward.3} parent=5 // pred_check
      %p454 = pneg %p453
    $region38: #{cnn_block_forward.3} parent=5 // pred_check_branch
      %456 = sbr.rel (%p454) target = $region40
    $region39: #{cnn_block_forward.3} parent=5 // pred_region
      %s457 = ssub.s32 %s9, 2
      // Predicated region
      $region41: #{cnn_block_forward.3} parent=39 // pred_check
        %p458 = pneg %p106
      $region42: #{cnn_block_forward.3} parent=39 // pred_check_branch
        %460 = sbr.rel (%p458) target = $region44
      $region43: #{cnn_block_forward.3} parent=39 // pred_region
        %s461 = smul.u32 32, %s15
        %p462 = scmp.lt.s32.totalorder %s461, 63
        %s463 = scalar_select %p462, %s461, 63
        %s464 = smul.addr %s463, 8
        %s465 = scalar_lea.vmem %s3, %s464
      $region44: #{cnn_block_forward.3} parent=39 // pred_fallthru
        _
    $region40: #{cnn_block_forward.3} parent=5 // pred_fallthru
      _
  $region6: #{cnn_block_forward.3} parent=0 // loop_footer
    %s13 = sadd.s32 1, %s9
  $region7: #{cnn_block_forward.3} parent=0 // loop_footer_branch
    %8 = sbr.rel target = $region3
  $region8: #{cnn_block_forward.3} parent=0 // loop_exit
    _

// kernel: cnn_block_forward.4
$region0: #{cnn_block_forward.4}
  #allocation0 [shape = 'u32[]', space=smem, size = 0x4, offset = 0x4, fixed_abs, tag = 'smem constant byte address 0x4 - core index']
  #allocation1 [shape = 'u32[144,128]{1,0:T(1,128)}', space=vmem, size = 0x12000, scoped, tag = 'internal scratch']
  #allocation2 [shape = 'f32[256,128]{1,0:T(8,128)}', space=vmem, size = 0x20000, scoped, tag = 'scratch operand']
  #allocation3 [shape = 'u32[2048]{0}', space=vmem, size = 0x2000, scoped, tag = 'scoped memory for cnn_block_forward.4']
  #allocation4 [shape = 'u32[2048]{0}', space=vmem, size = 0x2000, scoped, tag = 'scoped memory for cnn_block_forward.4']
  #allocation5 [shape = 'u32[2048]{0}', space=vmem, size = 0x2000, scoped, tag = 'scoped memory for cnn_block_forward.4']
  #allocation6 [shape = 'u32[2048]{0}', space=vmem, size = 0x2000, scoped, tag = 'scoped memory for cnn_block_forward.4']
  #allocation7 [shape = 'u32[2048]{0}', space=vmem, size = 0x2000, scoped, tag = 'scoped memory for cnn_block_forward.4']
  #allocation8 [shape = 'u32[2048]{0}', space=vmem, size = 0x2000, scoped, tag = 'scoped memory for cnn_block_forward.4']
  #allocation9 [shape = 'u32[2048]{0}', space=vmem, size = 0x2000, scoped, tag = 'scoped memory for cnn_block_forward.4']
  #allocation10 [shape = 'u32[2048]{0}', space=vmem, size = 0x2000, scoped, tag = 'scoped memory for cnn_block_forward.4']
  #allocation11 [shape = 'u32[2048]{0}', space=vmem, size = 0x2000, scoped, tag = 'scoped memory for cnn_block_forward.4']
  #allocation12 [shape = 'u32[2048]{0}', space=vmem, size = 0x2000, scoped, tag = 'scoped memory for cnn_block_forward.4']
  %s0 = inlined_call_operand.vmem [shape: bf16[512,36], index: 0, kind: input, shape index: {}]
  %s1 = inlined_call_operand.<no memory space> [shape: bf16[], index: 1, kind: input, shape index: {}]
  %s2 = inlined_call_operand.vmem [shape: bf16[36,8], index: 2, kind: input, shape index: {}]
  %s3 = inlined_call_operand.vmem [shape: bf16[512,128], index: 3, kind: output, shape index: {0}]
  %s4 = inlined_call_operand.vmem [shape: f32[16,128], index: 4, kind: output, shape index: {1}]
  %5 = xla_tuple %s3, %s4
  %s6 = sld [smem:[#allocation0]]
  $region57: #{cnn_block_forward.4} parent=0
    _
  %s8 = ssub.s32 1, %s6
  %s9 = scalar_select 0, %s8, %s6
  %v10 = vstv %s1
  %v11 = vunpack.i.l.bf16 %v10
  %v13 = vunpack.i.h.bf16 %v10
  %v15 = vstv %s1
  %v16 = vunpack.i.l.bf16 %v15
  %v18 = vunpack.i.h.bf16 %v15
  loop: start=0, step=1, limit=4
  $region2: #{cnn_block_forward.4} parent=0 // loop_pre_header
    _
  $region3: #{cnn_block_forward.4} parent=0 // loop_header
    %s21 = sphi 0, %s25
    %p22 = scmp.ge.s32.totalorder %s21, 4
    %s28 = sphi 0, %s47
    %s29 = sphi 0, %s43
    %s30 = sphi 0, %s39
    %s31 = sphi 0, %s28
    %s32 = sphi 0, %s29
    %s33 = sphi 0, %s30
    %s34 = sphi 0, %s31
    %s35 = sphi 0, %s32
    %s36 = sphi 0, %s33
    %s52 = sphi 0, %s54
    %s55 = sphi 0, %s52
    %s56 = sphi 0, %s55
    %s72 = sphi 0, %s56
    %s80 = sphi 0, %s82
    %s83 = sphi 0, %s80
    %s84 = sphi 0, %s83
    %s100 = sphi 0, %s84
    %s108 = sphi 0, %s110
    %s111 = sphi 0, %s108
    %s112 = sphi 0, %s111
    %s128 = sphi 0, %s112
    %s136 = sphi 0, %s138
    %s139 = sphi 0, %s136
    %s140 = sphi 0, %s139
    %s156 = sphi 0, %s140
  $region4: #{cnn_block_forward.4} parent=0 // loop_header_branch
    %24 = sbr.rel (%p22) target = $region8
  $region5: #{cnn_block_forward.4} parent=0 // loop_body
    %s26 = ssub.s32 %s21, 1
    %s27 = ssub.s32 %s21, 2
    %s37 = sadd.s32 1, %s30
    %p38 = scmp.ge.s32.totalorder %s37, 1
    %s39 = scalar_select %p38, 0, %s37
    %s40 = sadd.s32 1, %s29
    %s41 = scalar_select %p38, %s40, %s29
    %p42 = scmp.ge.s32.totalorder %s41, 1
    %s43 = scalar_select %p42, 0, %s41
    %s44 = sadd.s32 1, %s28
    %s45 = scalar_select %p42, %s44, %s28
    %p46 = scmp.ge.s32.totalorder %s45, 2
    %s47 = scalar_select %p46, 0, %s45
    %s48 = ssub.s32 %s28, %s47
    %s49 = ssub.s32 %s30, %s39
    %s50 = sor.u32 %s48, %s49
    %p51 = scmp.eq.s32.totalorder %s50, 0
    %s53 = sadd.s32 %s52, 1
    %s54 = scalar_select %p51, %s52, %s53
    %p57 = pneg %p51
    %p58 = scmp.eq.s32.totalorder %s21, 1
    %p59 = por %p57, %p58
    %p60 = scmp.ne.s32.totalorder %s52, %s55
    %p61 = scmp.eq.s32.totalorder %s21, 0
    %p62 = por %p60, %p61
    %p63 = scmp.ne.s32.totalorder %s52, %s55
    %p64 = scmp.eq.s32.totalorder %s26, 1
    %p65 = por %p63, %p64
    %p66 = scmp.ne.s32.totalorder %s55, %s56
    %p67 = scmp.eq.s32.totalorder %s26, 0
    %p68 = por %p66, %p67
    %p69 = scmp.ne.s32.totalorder %s55, %s56
    %p70 = scmp.eq.s32.totalorder %s27, 1
    %p71 = por %p69, %p70
    %p73 = scmp.ne.s32.totalorder %s56, %s72
    %p74 = scmp.eq.s32.totalorder %s27, 0
    %p75 = por %p73, %p74
    %s76 = ssub.s32 %s30, %s39
    %s77 = ssub.s32 %s29, %s43
    %s78 = sor.u32 %s76, %s77
    %p79 = scmp.eq.s32.totalorder %s78, 0
    %s81 = sadd.s32 %s80, 1
    %s82 = scalar_select %p79, %s80, %s81
    %p85 = pneg %p79
    %p86 = scmp.eq.s32.totalorder %s21, 1
    %p87 = por %p85, %p86
    %p88 = scmp.ne.s32.totalorder %s80, %s83
    %p89 = scmp.eq.s32.totalorder %s21, 0
    %p90 = por %p88, %p89
    %p91 = scmp.ne.s32.totalorder %s80, %s83
    %p92 = scmp.eq.s32.totalorder %s26, 1
    %p93 = por %p91, %p92
    %p94 = scmp.ne.s32.totalorder %s83, %s84
    %p95 = scmp.eq.s32.totalorder %s26, 0
    %p96 = por %p94, %p95
    %p97 = scmp.ne.s32.totalorder %s83, %s84
    %p98 = scmp.eq.s32.totalorder %s27, 1
    %p99 = por %p97, %p98
    %p101 = scmp.ne.s32.totalorder %s84, %s100
    %p102 = scmp.eq.s32.totalorder %s27, 0
    %p103 = por %p101, %p102
    %s104 = ssub.s32 %s28, %s47
    %s105 = ssub.s32 %s29, %s43
    %s106 = sor.u32 %s104, %s105
    %p107 = scmp.eq.s32.totalorder %s106, 0
    %s109 = sadd.s32 %s108, 1
    %s110 = scalar_select %p107, %s108, %s109
    %p113 = pneg %p107
    %p114 = scmp.eq.s32.totalorder %s21, 1
    %p115 = por %p113, %p114
    %p116 = scmp.ne.s32.totalorder %s108, %s111
    %p117 = scmp.eq.s32.totalorder %s21, 0
    %p118 = por %p116, %p117
    %p119 = scmp.ne.s32.totalorder %s108, %s111
    %p120 = scmp.eq.s32.totalorder %s26, 1
    %p121 = por %p119, %p120
    %p122 = scmp.ne.s32.totalorder %s111, %s112
    %p123 = scmp.eq.s32.totalorder %s26, 0
    %p124 = por %p122, %p123
    %p125 = scmp.ne.s32.totalorder %s111, %s112
    %p126 = scmp.eq.s32.totalorder %s27, 1
    %p127 = por %p125, %p126
    %p129 = scmp.ne.s32.totalorder %s112, %s128
    %p130 = scmp.eq.s32.totalorder %s27, 0
    %p131 = por %p129, %p130
    %s132 = ssub.s32 %s28, %s47
    %s133 = ssub.s32 %s29, %s43
    %s134 = sor.u32 %s132, %s133
    %p135 = scmp.eq.s32.totalorder %s134, 0
    %s137 = sadd.s32 %s136, 1
    %s138 = scalar_select %p135, %s136, %s137
    %p141 = pneg %p135
    %p142 = scmp.eq.s32.totalorder %s21, 1
    %p143 = por %p141, %p142
    %p144 = scmp.ne.s32.totalorder %s136, %s139
    %p145 = scmp.eq.s32.totalorder %s21, 0
    %p146 = por %p144, %p145
    %p147 = scmp.ne.s32.totalorder %s136, %s139
    %p148 = scmp.eq.s32.totalorder %s26, 1
    %p149 = por %p147, %p148
    %p150 = scmp.ne.s32.totalorder %s139, %s140
    %p151 = scmp.eq.s32.totalorder %s26, 0
    %p152 = por %p150, %p151
    %p153 = scmp.ne.s32.totalorder %s139, %s140
    %p154 = scmp.eq.s32.totalorder %s27, 1
    %p155 = por %p153, %p154
    %p157 = scmp.ne.s32.totalorder %s140, %s156
    %p158 = scmp.eq.s32.totalorder %s27, 0
    %p159 = por %p157, %p158
    %p160 = scmp.le.s32.totalorder 1, %s21
    %p161 = scmp.lt.s32.totalorder %s21, 3
    %p162 = pnand %p160, %p161
    %p163 = pneg %p162
    // Predicated region
    $region9: #{cnn_block_forward.4} parent=5 // pred_check
      _
    $region10: #{cnn_block_forward.4} parent=5 // pred_check_branch
      %165 = sbr.rel (%p162) target = $region12
    $region11: #{cnn_block_forward.4} parent=5 // pred_region
      %s166 = ssub.s32 %s21, 1
      // Predicated region
      $region13: #{cnn_block_forward.4} parent=11 // pred_check
        %p167 = pneg %p96
      $region14: #{cnn_block_forward.4} parent=11 // pred_check_branch
        %169 = sbr.rel (%p167) target = $region16
      $region15: #{cnn_block_forward.4} parent=11 // pred_region
        %s170 = smul.u32 16, %s33
        %s171 = ssub.s32 5, %s170
        %p172 = scmp.gt.s32.totalorder %s171, 0
        %s173 = scalar_select %p172, %s171, 0
        %s174 = smul.u32 64, %s173
        %s175 = ssub.s32 1, %s32
        %s176 = smul.u32 %s174, %s175
        %p177 = scmp.lt.s32.totalorder %s170, 4
        %s178 = scalar_select %p177, %s170, 4
        %p179 = scmp.lt.s32.totalorder %s32, 0
        %s180 = scalar_select %p179, %s32, 0
        %s181 = sadd.s32 %s180, %s178
        %s182 = smul.addr %s181, 4
        %s183 = scalar_lea.vmem %s2, %s182
        %s184 = smul.u32 16, %s33
        %s185 = ssub.s32 5, %s184
        %p186 = scmp.gt.s32.totalorder %s185, 0
        %s187 = scalar_select %p186, %s185, 0
        %s188 = smul.u32 64, %s187
        %s189 = ssub.s32 1, %s32
        %s190 = smul.u32 %s188, %s189
      $region16: #{cnn_block_forward.4} parent=11 // pred_fallthru
        _
    $region12: #{cnn_block_forward.4} parent=5 // pred_fallthru
      _
    %p191 = scmp.lt.s32.totalorder %s21, 2
    // Predicated region
    $region17: #{cnn_block_forward.4} parent=5 // pred_check
      %p192 = pneg %p191
    $region18: #{cnn_block_forward.4} parent=5 // pred_check_branch
      %194 = sbr.rel (%p192) target = $region20
    $region19: #{cnn_block_forward.4} parent=5 // pred_region
      // Predicated region
      $region21: #{cnn_block_forward.4} parent=19 // pred_check
        %p195 = pneg %p62
      $region22: #{cnn_block_forward.4} parent=19 // pred_check_branch
        %197 = sbr.rel (%p195) target = $region24
      $region23: #{cnn_block_forward.4} parent=19 // pred_region
        %s198 = smul.u32 32, %s28
        %s199 = ssub.s32 1, %s30
        %s200 = smul.u32 2048, %s199
        %p201 = scmp.lt.s32.totalorder %s198, 63
        %s202 = scalar_select %p201, %s198, 63
        %p203 = scmp.lt.s32.totalorder %s30, 0
        %s204 = scalar_select %p203, %s30, 0
        %s205 = sadd.s32 %s204, %s202
        %s206 = smul.addr %s205, 4
        %s207 = scalar_lea.vmem %s0, %s206
        %s208 = smul.u32 32, %s28
        %s209 = ssub.s32 1, %s30
        %s210 = smul.u32 2048, %s209
      $region24: #{cnn_block_forward.4} parent=19 // pred_fallthru
        _
    $region20: #{cnn_block_forward.4} parent=5 // pred_fallthru
      _
    %p211 = scmp.le.s32.totalorder 1, %s21
    %p212 = scmp.lt.s32.totalorder %s21, 3
    %p213 = pnand %p211, %p212
    %p214 = pneg %p213
    // Predicated region
    $region25: #{cnn_block_forward.4} parent=5 // pred_check
      _
    $region26: #{cnn_block_forward.4} parent=5 // pred_check_branch
      %216 = sbr.rel (%p213) target = $region28
    $region27: #{cnn_block_forward.4} parent=5 // pred_region
      #allocation13 [shape = 'u8[65536]{0}', space=vmem, size = 0x10000, dematerialized = true, scoped, tag = 'FusionAdapter Buffer %fusion.1 = bf16[512,128]{1,0:T(8,128)(2,1)} fusion(%param_0.68, %param_1.53), kind=kLoop, calls=%fused_computation.1.clone, metadata={op_name="jit(cnn_block_forward)/jit(_pad)/pad" stack_frame_id=19}']
      #allocation14 [shape = 'u8[32768]{0}', space=vmem, size = 0x8000, dematerialized = true, scoped, tag = 'FusionAdapter Buffer %fusion.18 = bf16[128,128]{1,0:T(8,128)(2,1)} fusion(%param_2.21, %param_1.53), kind=kLoop, calls=%fused_computation.27.clone, metadata={op_name="jit(cnn_block_forward)/jit(_pad)/pad" stack_frame_id=21}']
      %s217 = ssub.s32 %s21, 1
      %s218 = smul.u32 32, %s31
      %s219 = ssub.s32 1, %s33
      %s220 = smul.u32 2048, %s219
      %p221 = scmp.lt.s32.totalorder %s218, 63
      %s222 = scalar_select %p221, %s218, 63
      %p223 = scmp.lt.s32.totalorder %s33, 0
      %s224 = scalar_select %p223, %s33, 0
      %s225 = sadd.s32 %s224, %s222
      %s226 = smul.addr %s225, 4
      %s227 = scalar_lea.vmem %s0, %s226
      %p228 = pneg %p68
      %p229 = pneg %p65
      %s230 = smul.u32 16, %s33
      %s231 = ssub.s32 5, %s230
      %p232 = scmp.gt.s32.totalorder %s231, 0
      %s233 = scalar_select %p232, %s231, 0
      %s234 = smul.u32 64, %s233
      %s235 = ssub.s32 1, %s32
      %s236 = smul.u32 %s234, %s235
      %p237 = scmp.lt.s32.totalorder %s230, 4
      %s238 = scalar_select %p237, %s230, 4
      %p239 = scmp.lt.s32.totalorder %s32, 0
      %s240 = scalar_select %p239, %s32, 0
      %s241 = sadd.s32 %s240, %s238
      %s242 = smul.addr %s241, 4
      %s243 = scalar_lea.vmem %s2, %s242
      %p244 = pneg %p96
      %p245 = pneg %p93
      %p246 = pneg %p124
      %p247 = pneg %p121
      %s248 = smul.u32 32, %s31
      %p249 = scmp.lt.s32.totalorder %s248, 63
      %s250 = scalar_select %p249, %s248, 63
      %p251 = scmp.lt.s32.totalorder %s32, 0
      %s252 = scalar_select %p251, %s32, 0
      %s253 = sadd.s32 %s252, %s250
      %s254 = smul.addr %s253, 4
      %s255 = scalar_lea.vmem %s3, %s254
      %p256 = pneg %p152
      %p257 = pneg %p149
      %p258 = scmp.lt.s32.totalorder %s31, 1
      %s259 = scalar_select %p258, %s31, 1
      %p260 = scmp.lt.s32.totalorder %s32, 0
      %s261 = scalar_select %p260, %s32, 0
      %s262 = sadd.s32 %s261, %s259
      %s263 = smul.addr %s262, 8
      %s264 = scalar_lea.vmem %s4, %s263
      %s265 = smul.u32 32, %s31
      %s266 = ssub.s32 1, %s33
      %s267 = smul.u32 2048, %s266
      %p268 = scmp.lt.s32.totalorder %s265, 63
      %s269 = scalar_select %p268, %s265, 63
      %p270 = scmp.lt.s32.totalorder %s33, 0
      %s271 = scalar_select %p270, %s33, 0
      %s272 = sadd.s32 %s271, %s269
      %s273 = smul.addr %s272, 4
      %s274 = scalar_lea.vmem %s0, %s273
      %s275 = smul.u32 32, %s31
      %s276 = ssub.s32 1, %s33
      %s277 = smul.u32 2048, %s276
      %s278 = smul.u32 16, %s33
      %s279 = ssub.s32 5, %s278
      %p280 = scmp.gt.s32.totalorder %s279, 0
      %s281 = scalar_select %p280, %s279, 0
      %s282 = smul.u32 64, %s281
      %s283 = ssub.s32 1, %s32
      %s284 = smul.u32 %s282, %s283
      %p285 = scmp.lt.s32.totalorder %s278, 4
      %s286 = scalar_select %p285, %s278, 4
      %p287 = scmp.lt.s32.totalorder %s32, 0
      %s288 = scalar_select %p287, %s32, 0
      %s289 = sadd.s32 %s288, %s286
      %s290 = smul.addr %s289, 4
      %s291 = scalar_lea.vmem %s2, %s290
      %s292 = smul.u32 16, %s33
      %s293 = ssub.s32 5, %s292
      %p294 = scmp.gt.s32.totalorder %s293, 0
      %s295 = scalar_select %p294, %s293, 0
      %s296 = smul.u32 64, %s295
      %s297 = ssub.s32 1, %s32
      %s298 = smul.u32 %s296, %s297
      %s299 = smul.u32 32, %s31
      %p300 = scmp.lt.s32.totalorder %s299, 63
      %s301 = scalar_select %p300, %s299, 63
      %p302 = scmp.lt.s32.totalorder %s32, 0
      %s303 = scalar_select %p302, %s32, 0
      %s304 = sadd.s32 %s303, %s301
      %s305 = smul.addr %s304, 4
      %s306 = scalar_lea.vmem %s3, %s305
      %s307 = smul.u32 32, %s31
      %p308 = scmp.lt.s32.totalorder %s31, 1
      %s309 = scalar_select %p308, %s31, 1
      %p310 = scmp.lt.s32.totalorder %s32, 0
      %s311 = scalar_select %p310, %s32, 0
      %s312 = sadd.s32 %s311, %s309
      %s313 = smul.addr %s312, 8
      %s314 = scalar_lea.vmem %s4, %s313
      %s315 = ssub.s32 0, %s33
      %p316 = scmp.lt.s32.totalorder %s315, 0
      %s317 = scalar_select %p316, 0, 255
      %s318 = sshrl.u32 %s317, 1
      %s319 = sor.u32 %s317, %s318
      %s320 = sand.u32 %s319, 85
      %s321 = sshrl.u32 %s320, 1
      %s322 = sor.u32 %s320, %s321
      %s323 = sand.u32 51, %s322
      %s324 = sshrl.u32 %s323, 2
      %s325 = sor.u32 %s323, %s324
      %s326 = sand.u32 15, %s325
      %v327 = vld [vmem:[%s274] sm:%s326]
      %v328 = vunpack.c.l.bf16 %v327
      %v329 = vunpack.c.h.bf16 %v327
      %s330 = ssub.s32 0, %s33
      %v331 = vstv %s330
      %vm332 = vcmp.lt.s32.totalorder %v331, 0
      %v333 = vsel %vm332, %v11, %v328
      %s334 = smul.addr %s33, 128
      %v335 = vlaneseq
      %v336 = vand.u32 %v335, 127
      %v337 = vstv %s334
      %v338 = vadd.s32 %v336, %v337
      %vm339 = vcmp.lt.s32.totalorder %v338, 36
      %v340 = vsel %vm339, %v333, %v11
      %v341 = vpack.c.bf16 0.0, %v340
      %s343 = ssub.s32 16, 1
      %344 = vst [vmem:[#allocation13] sm:%s343] %v341
      %s345 = scalar_lea.vmem %s274, 4
      %s346 = ssub.s32 0, %s33
      %p347 = scmp.lt.s32.totalorder %s346, 0
      %s348 = scalar_select %p347, 0, 255
      %s349 = sshrl.u32 %s348, 1
      %s350 = sor.u32 %s348, %s349
      %s351 = sand.u32 %s350, 85
      %s352 = sshrl.u32 %s351, 1
      %s353 = sor.u32 %s351, %s352
      %s354 = sand.u32 51, %s353
      %s355 = sshrl.u32 %s354, 2
      %s356 = sor.u32 %s354, %s355
      %s357 = sand.u32 15, %s356
      %v358 = vld [vmem:[%s345] sm:%s357]
      %v359 = vunpack.c.l.bf16 %v358
      %v360 = vunpack.c.h.bf16 %v358
      %s361 = ssub.s32 0, %s33
      %v362 = vstv %s361
      %vm363 = vcmp.lt.s32.totalorder %v362, 0
      %v364 = vsel %vm363, %v11, %v359
      %s365 = smul.addr %s33, 128
      %v366 = vlaneseq
      %v367 = vand.u32 %v366, 127
      %v368 = vstv %s365
      %v369 = vadd.s32 %v367, %v368
      %vm370 = vcmp.lt.s32.totalorder %v369, 36
      %v371 = vsel %vm370, %v364, %v11
      %s372 = scalar_lea.vmem [#allocation13], 4
      %v373 = vpack.c.bf16 0.0, %v371
      %s375 = ssub.s32 16, 1
      %376 = vst [vmem:[%s372] sm:%s375] %v373
      %s377 = scalar_lea.vmem %s274, 8
      %s378 = ssub.s32 0, %s33
      %p379 = scmp.lt.s32.totalorder %s378, 0
      %s380 = scalar_select %p379, 0, 255
      %s381 = sshrl.u32 %s380, 1
      %s382 = sor.u32 %s380, %s381
      %s383 = sand.u32 %s382, 85
      %s384 = sshrl.u32 %s383, 1
      %s385 = sor.u32 %s383, %s384
      %s386 = sand.u32 51, %s385
      %s387 = sshrl.u32 %s386, 2
      %s388 = sor.u32 %s386, %s387
      %s389 = sand.u32 15, %s388
      %v390 = vld [vmem:[%s377] sm:%s389]
      %v391 = vunpack.c.l.bf16 %v390
      %v392 = vunpack.c.h.bf16 %v390
      %s393 = ssub.s32 0, %s33
      %v394 = vstv %s393
      %vm395 = vcmp.lt.s32.totalorder %v394, 0
      %v396 = vsel %vm395, %v11, %v391
      %s397 = smul.addr %s33, 128
      %v398 = vlaneseq
      %v399 = vand.u32 %v398, 127
      %v400 = vstv %s397
      %v401 = vadd.s32 %v399, %v400
      %vm402 = vcmp.lt.s32.totalorder %v401, 36
      %v403 = vsel %vm402, %v396, %v11
      %s404 = scalar_lea.vmem [#allocation13], 8
      %v405 = vpack.c.bf16 0.0, %v403
      %s407 = ssub.s32 16, 1
      %408 = vst [vmem:[%s404] sm:%s407] %v405
      %s409 = scalar_lea.vmem %s274, 12
      %s410 = ssub.s32 0, %s33
      %p411 = scmp.lt.s32.totalorder %s410, 0
      %s412 = scalar_select %p411, 0, 255
      %s413 = sshrl.u32 %s412, 1
      %s414 = sor.u32 %s412, %s413
      %s415 = sand.u32 %s414, 85
      %s416 = sshrl.u32 %s415, 1
      %s417 = sor.u32 %s415, %s416
      %s418 = sand.u32 51, %s417
      %s419 = sshrl.u32 %s418, 2
      %s420 = sor.u32 %s418, %s419
      %s421 = sand.u32 15, %s420
      %v422 = vld [vmem:[%s409] sm:%s421]
      %v423 = vunpack.c.l.bf16 %v422
      %v424 = vunpack.c.h.bf16 %v422
      %s425 = ssub.s32 0, %s33
      %v426 = vstv %s425
      %vm427 = vcmp.lt.s32.totalorder %v426, 0
      %v428 = vsel %vm427, %v11, %v423
      %s429 = smul.addr %s33, 128
      %v430 = vlaneseq
      %v431 = vand.u32 %v430, 127
      %v432 = vstv %s429
      %v433 = vadd.s32 %v431, %v432
      %vm434 = vcmp.lt.s32.totalorder %v433, 36
      %v435 = vsel %vm434, %v428, %v11
      %s436 = scalar_lea.vmem [#allocation13], 12
      %v437 = vpack.c.bf16 0.0, %v435
      %s439 = ssub.s32 16, 1
      %440 = vst [vmem:[%s436] sm:%s439] %v437
      %s441 = scalar_lea.vmem %s274, 16
      %s442 = ssub.s32 0, %s33
      %p443 = scmp.lt.s32.totalorder %s442, 0
      %s444 = scalar_select %p443, 0, 255
      %s445 = sshrl.u32 %s444, 1
      %s446 = sor.u32 %s444, %s445
      %s447 = sand.u32 %s446, 85
      %s448 = sshrl.u32 %s447, 1
      %s449 = sor.u32 %s447, %s448
      %s450 = sand.u32 51, %s449
      %s451 = sshrl.u32 %s450, 2
      %s452 = sor.u32 %s450, %s451
      %s453 = sand.u32 15, %s452
      %v454 = vld [vmem:[%s441] sm:%s453]
      %v455 = vunpack.c.l.bf16 %v454
      %v456 = vunpack.c.h.bf16 %v454
      %s457 = ssub.s32 0, %s33
      %v458 = vstv %s457
      %vm459 = vcmp.lt.s32.totalorder %v458, 0
      %v460 = vsel %vm459, %v11, %v455
      %s461 = smul.addr %s33, 128
      %v462 = vlaneseq
      %v463 = vand.u32 %v462, 127
      %v464 = vstv %s461
      %v465 = vadd.s32 %v463, %v464
      %vm466 = vcmp.lt.s32.totalorder %v465, 36
      %v467 = vsel %vm466, %v460, %v11
      %s468 = scalar_lea.vmem [#allocation13], 16
      %v469 = vpack.c.bf16 0.0, %v467
      %s471 = ssub.s32 16, 1
      %472 = vst [vmem:[%s468] sm:%s471] %v469
      %s473 = scalar_lea.vmem %s274, 20
      %s474 = ssub.s32 0, %s33
      %p475 = scmp.lt.s32.totalorder %s474, 0
      %s476 = scalar_select %p475, 0, 255
      %s477 = sshrl.u32 %s476, 1
      %s478 = sor.u32 %s476, %s477
      %s479 = sand.u32 %s478, 85
      %s480 = sshrl.u32 %s479, 1
      %s481 = sor.u32 %s479, %s480
      %s482 = sand.u32 51, %s481
      %s483 = sshrl.u32 %s482, 2
      %s484 = sor.u32 %s482, %s483
      %s485 = sand.u32 15, %s484
      %v486 = vld [vmem:[%s473] sm:%s485]
      %v487 = vunpack.c.l.bf16 %v486
      %v488 = vunpack.c.h.bf16 %v486
      %s489 = ssub.s32 0, %s33
      %v490 = vstv %s489
      %vm491 = vcmp.lt.s32.totalorder %v490, 0
      %v492 = vsel %vm491, %v11, %v487
      %s493 = smul.addr %s33, 128
      %v494 = vlaneseq
      %v495 = vand.u32 %v494, 127
      %v496 = vstv %s493
      %v497 = vadd.s32 %v495, %v496
      %vm498 = vcmp.lt.s32.totalorder %v497, 36
      %v499 = vsel %vm498, %v492, %v11
      %s500 = scalar_lea.vmem [#allocation13], 20
      %v501 = vpack.c.bf16 0.0, %v499
      %s503 = ssub.s32 16, 1
      %504 = vst [vmem:[%s500] sm:%s503] %v501
      %s505 = scalar_lea.vmem %s274, 24
      %s506 = ssub.s32 0, %s33
      %p507 = scmp.lt.s32.totalorder %s506, 0
      %s508 = scalar_select %p507, 0, 255
      %s509 = sshrl.u32 %s508, 1
      %s510 = sor.u32 %s508, %s509
      %s511 = sand.u32 %s510, 85
      %s512 = sshrl.u32 %s511, 1
      %s513 = sor.u32 %s511, %s512
      %s514 = sand.u32 51, %s513
      %s515 = sshrl.u32 %s514, 2
      %s516 = sor.u32 %s514, %s515
      %s517 = sand.u32 15, %s516
      %v518 = vld [vmem:[%s505] sm:%s517]
      %v519 = vunpack.c.l.bf16 %v518
      %v520 = vunpack.c.h.bf16 %v518
      %s521 = ssub.s32 0, %s33
      %v522 = vstv %s521
      %vm523 = vcmp.lt.s32.totalorder %v522, 0
      %v524 = vsel %vm523, %v11, %v519
      %s525 = smul.addr %s33, 128
      %v526 = vlaneseq
      %v527 = vand.u32 %v526, 127
      %v528 = vstv %s525
      %v529 = vadd.s32 %v527, %v528
      %vm530 = vcmp.lt.s32.totalorder %v529, 36
      %v531 = vsel %vm530, %v524, %v11
      %s532 = scalar_lea.vmem [#allocation13], 24
      %v533 = vpack.c.bf16 0.0, %v531
      %s535 = ssub.s32 16, 1
      %536 = vst [vmem:[%s532] sm:%s535] %v533
      %s537 = scalar_lea.vmem %s274, 28
      %s538 = ssub.s32 0, %s33
      %p539 = scmp.lt.s32.totalorder %s538, 0
      %s540 = scalar_select %p539, 0, 255
      %s541 = sshrl.u32 %s540, 1
      %s542 = sor.u32 %s540, %s541
      %s543 = sand.u32 %s542, 85
      %s544 = sshrl.u32 %s543, 1
      %s545 = sor.u32 %s543, %s544
      %s546 = sand.u32 51, %s545
      %s547 = sshrl.u32 %s546, 2
      %s548 = sor.u32 %s546, %s547
      %s549 = sand.u32 15, %s548
      %v550 = vld [vmem:[%s537] sm:%s549]
      %v551 = vunpack.c.l.bf16 %v550
      %v552 = vunpack.c.h.bf16 %v550
      %s553 = ssub.s32 0, %s33
      %v554 = vstv %s553
      %vm555 = vcmp.lt.s32.totalorder %v554, 0
      %v556 = vsel %vm555, %v11, %v551
      %s557 = smul.addr %s33, 128
      %v558 = vlaneseq
      %v559 = vand.u32 %v558, 127
      %v560 = vstv %s557
      %v561 = vadd.s32 %v559, %v560
      %vm562 = vcmp.lt.s32.totalorder %v561, 36
      %v563 = vsel %vm562, %v556, %v11
      %s564 = scalar_lea.vmem [#allocation13], 28
      %v565 = vpack.c.bf16 0.0, %v563
      %s567 = ssub.s32 16, 1
      %568 = vst [vmem:[%s564] sm:%s567] %v565
      %s569 = scalar_lea.vmem %s274, 32
      %s570 = ssub.s32 0, %s33
      %p571 = scmp.lt.s32.totalorder %s570, 0
      %s572 = scalar_select %p571, 0, 255
      %s573 = sshrl.u32 %s572, 1
      %s574 = sor.u32 %s572, %s573
      %s575 = sand.u32 %s574, 85
      %s576 = sshrl.u32 %s575, 1
      %s577 = sor.u32 %s575, %s576
      %s578 = sand.u32 51, %s577
      %s579 = sshrl.u32 %s578, 2
      %s580 = sor.u32 %s578, %s579
      %s581 = sand.u32 15, %s580
      %v582 = vld [vmem:[%s569] sm:%s581]
      %v583 = vunpack.c.l.bf16 %v582
      %v584 = vunpack.c.h.bf16 %v582
      %s585 = ssub.s32 0, %s33
      %v586 = vstv %s585
      %vm587 = vcmp.lt.s32.totalorder %v586, 0
      %v588 = vsel %vm587, %v11, %v583
      %s589 = smul.addr %s33, 128
      %v590 = vlaneseq
      %v591 = vand.u32 %v590, 127
      %v592 = vstv %s589
      %v593 = vadd.s32 %v591, %v592
      %vm594 = vcmp.lt.s32.totalorder %v593, 36
      %v595 = vsel %vm594, %v588, %v11
      %s596 = scalar_lea.vmem [#allocation13], 32
      %v597 = vpack.c.bf16 0.0, %v595
      %s599 = ssub.s32 16, 1
      %600 = vst [vmem:[%s596] sm:%s599] %v597
      %s601 = scalar_lea.vmem %s274, 36
      %s602 = ssub.s32 0, %s33
      %p603 = scmp.lt.s32.totalorder %s602, 0
      %s604 = scalar_select %p603, 0, 255
      %s605 = sshrl.u32 %s604, 1
      %s606 = sor.u32 %s604, %s605
      %s607 = sand.u32 %s606, 85
      %s608 = sshrl.u32 %s607, 1
      %s609 = sor.u32 %s607, %s608
      %s610 = sand.u32 51, %s609
      %s611 = sshrl.u32 %s610, 2
      %s612 = sor.u32 %s610, %s611
      %s613 = sand.u32 15, %s612
      %v614 = vld [vmem:[%s601] sm:%s613]
      %v615 = vunpack.c.l.bf16 %v614
      %v616 = vunpack.c.h.bf16 %v614
      %s617 = ssub.s32 0, %s33
      %v618 = vstv %s617
      %vm619 = vcmp.lt.s32.totalorder %v618, 0
      %v620 = vsel %vm619, %v11, %v615
      %s621 = smul.addr %s33, 128
      %v622 = vlaneseq
      %v623 = vand.u32 %v622, 127
      %v624 = vstv %s621
      %v625 = vadd.s32 %v623, %v624
      %vm626 = vcmp.lt.s32.totalorder %v625, 36
      %v627 = vsel %vm626, %v620, %v11
      %s628 = scalar_lea.vmem [#allocation13], 36
      %v629 = vpack.c.bf16 0.0, %v627
      %s631 = ssub.s32 16, 1
      %632 = vst [vmem:[%s628] sm:%s631] %v629
      %s633 = scalar_lea.vmem %s274, 40
      %s634 = ssub.s32 0, %s33
      %p635 = scmp.lt.s32.totalorder %s634, 0
      %s636 = scalar_select %p635, 0, 255
      %s637 = sshrl.u32 %s636, 1
      %s638 = sor.u32 %s636, %s637
      %s639 = sand.u32 %s638, 85
      %s640 = sshrl.u32 %s639, 1
      %s641 = sor.u32 %s639, %s640
      %s642 = sand.u32 51, %s641
      %s643 = sshrl.u32 %s642, 2
      %s644 = sor.u32 %s642, %s643
      %s645 = sand.u32 15, %s644
      %v646 = vld [vmem:[%s633] sm:%s645]
      %v647 = vunpack.c.l.bf16 %v646
      %v648 = vunpack.c.h.bf16 %v646
      %s649 = ssub.s32 0, %s33
      %v650 = vstv %s649
      %vm651 = vcmp.lt.s32.totalorder %v650, 0
      %v652 = vsel %vm651, %v11, %v647
      %s653 = smul.addr %s33, 128
      %v654 = vlaneseq
      %v655 = vand.u32 %v654, 127
      %v656 = vstv %s653
      %v657 = vadd.s32 %v655, %v656
      %vm658 = vcmp.lt.s32.totalorder %v657, 36
      %v659 = vsel %vm658, %v652, %v11
      %s660 = scalar_lea.vmem [#allocation13], 40
      %v661 = vpack.c.bf16 0.0, %v659
      %s663 = ssub.s32 16, 1
      %664 = vst [vmem:[%s660] sm:%s663] %v661
      %s665 = scalar_lea.vmem %s274, 44
      %s666 = ssub.s32 0, %s33
      %p667 = scmp.lt.s32.totalorder %s666, 0
      %s668 = scalar_select %p667, 0, 255
      %s669 = sshrl.u32 %s668, 1
      %s670 = sor.u32 %s668, %s669
      %s671 = sand.u32 %s670, 85
      %s672 = sshrl.u32 %s671, 1
      %s673 = sor.u32 %s671, %s672
      %s674 = sand.u32 51, %s673
      %s675 = sshrl.u32 %s674, 2
      %s676 = sor.u32 %s674, %s675
      %s677 = sand.u32 15, %s676
      %v678 = vld [vmem:[%s665] sm:%s677]
      %v679 = vunpack.c.l.bf16 %v678
      %v680 = vunpack.c.h.bf16 %v678
      %s681 = ssub.s32 0, %s33
      %v682 = vstv %s681
      %vm683 = vcmp.lt.s32.totalorder %v682, 0
      %v684 = vsel %vm683, %v11, %v679
      %s685 = smul.addr %s33, 128
      %v686 = vlaneseq
      %v687 = vand.u32 %v686, 127
      %v688 = vstv %s685
      %v689 = vadd.s32 %v687, %v688
      %vm690 = vcmp.lt.s32.totalorder %v689, 36
      %v691 = vsel %vm690, %v684, %v11
      %s692 = scalar_lea.vmem [#allocation13], 44
      %v693 = vpack.c.bf16 0.0, %v691
      %s695 = ssub.s32 16, 1
      %696 = vst [vmem:[%s692] sm:%s695] %v693
      %s697 = scalar_lea.vmem %s274, 48
      %s698 = ssub.s32 0, %s33
      %p699 = scmp.lt.s32.totalorder %s698, 0
      %s700 = scalar_select %p699, 0, 255
      %s701 = sshrl.u32 %s700, 1
      %s702 = sor.u32 %s700, %s701
      %s703 = sand.u32 %s702, 85
      %s704 = sshrl.u32 %s703, 1
      %s705 = sor.u32 %s703, %s704
      %s706 = sand.u32 51, %s705
      %s707 = sshrl.u32 %s706, 2
      %s708 = sor.u32 %s706, %s707
      %s709 = sand.u32 15, %s708
      %v710 = vld [vmem:[%s697] sm:%s709]
      %v711 = vunpack.c.l.bf16 %v710
      %v712 = vunpack.c.h.bf16 %v710
      %s713 = ssub.s32 0, %s33
      %v714 = vstv %s713
      %vm715 = vcmp.lt.s32.totalorder %v714, 0
      %v716 = vsel %vm715, %v11, %v711
      %s717 = smul.addr %s33, 128
      %v718 = vlaneseq
      %v719 = vand.u32 %v718, 127
      %v720 = vstv %s717
      %v721 = vadd.s32 %v719, %v720
      %vm722 = vcmp.lt.s32.totalorder %v721, 36
      %v723 = vsel %vm722, %v716, %v11
      %s724 = scalar_lea.vmem [#allocation13], 48
      %v725 = vpack.c.bf16 0.0, %v723
      %s727 = ssub.s32 16, 1
      %728 = vst [vmem:[%s724] sm:%s727] %v725
      %s729 = scalar_lea.vmem %s274, 52
      %s730 = ssub.s32 0, %s33
      %p731 = scmp.lt.s32.totalorder %s730, 0
      %s732 = scalar_select %p731, 0, 255
      %s733 = sshrl.u32 %s732, 1
      %s734 = sor.u32 %s732, %s733
      %s735 = sand.u32 %s734, 85
      %s736 = sshrl.u32 %s735, 1
      %s737 = sor.u32 %s735, %s736
      %s738 = sand.u32 51, %s737
      %s739 = sshrl.u32 %s738, 2
      %s740 = sor.u32 %s738, %s739
      %s741 = sand.u32 15, %s740
      %v742 = vld [vmem:[%s729] sm:%s741]
      %v743 = vunpack.c.l.bf16 %v742
      %v744 = vunpack.c.h.bf16 %v742
      %s745 = ssub.s32 0, %s33
      %v746 = vstv %s745
      %vm747 = vcmp.lt.s32.totalorder %v746, 0
      %v748 = vsel %vm747, %v11, %v743
      %s749 = smul.addr %s33, 128
      %v750 = vlaneseq
      %v751 = vand.u32 %v750, 127
      %v752 = vstv %s749
      %v753 = vadd.s32 %v751, %v752
      %vm754 = vcmp.lt.s32.totalorder %v753, 36
      %v755 = vsel %vm754, %v748, %v11
      %s756 = scalar_lea.vmem [#allocation13], 52
      %v757 = vpack.c.bf16 0.0, %v755
      %s759 = ssub.s32 16, 1
      %760 = vst [vmem:[%s756] sm:%s759] %v757
      %s761 = scalar_lea.vmem %s274, 56
      %s762 = ssub.s32 0, %s33
      %p763 = scmp.lt.s32.totalorder %s762, 0
      %s764 = scalar_select %p763, 0, 255
      %s765 = sshrl.u32 %s764, 1
      %s766 = sor.u32 %s764, %s765
      %s767 = sand.u32 %s766, 85
      %s768 = sshrl.u32 %s767, 1
      %s769 = sor.u32 %s767, %s768
      %s770 = sand.u32 51, %s769
      %s771 = sshrl.u32 %s770, 2
      %s772 = sor.u32 %s770, %s771
      %s773 = sand.u32 15, %s772
      %v774 = vld [vmem:[%s761] sm:%s773]
      %v775 = vunpack.c.l.bf16 %v774
      %v776 = vunpack.c.h.bf16 %v774
      %s777 = ssub.s32 0, %s33
      %v778 = vstv %s777
      %vm779 = vcmp.lt.s32.totalorder %v778, 0
      %v780 = vsel %vm779, %v11, %v775
      %s781 = smul.addr %s33, 128
      %v782 = vlaneseq
      %v783 = vand.u32 %v782, 127
      %v784 = vstv %s781
      %v785 = vadd.s32 %v783, %v784
      %vm786 = vcmp.lt.s32.totalorder %v785, 36
      %v787 = vsel %vm786, %v780, %v11
      %s788 = scalar_lea.vmem [#allocation13], 56
      %v789 = vpack.c.bf16 0.0, %v787
      %s791 = ssub.s32 16, 1
      %792 = vst [vmem:[%s788] sm:%s791] %v789
      %s793 = scalar_lea.vmem %s274, 60
      %s794 = ssub.s32 0, %s33
      %p795 = scmp.lt.s32.totalorder %s794, 0
      %s796 = scalar_select %p795, 0, 255
      %s797 = sshrl.u32 %s796, 1
      %s798 = sor.u32 %s796, %s797
      %s799 = sand.u32 %s798, 85
      %s800 = sshrl.u32 %s799, 1
      %s801 = sor.u32 %s799, %s800
      %s802 = sand.u32 51, %s801
      %s803 = sshrl.u32 %s802, 2
      %s804 = sor.u32 %s802, %s803
      %s805 = sand.u32 15, %s804
      %v806 = vld [vmem:[%s793] sm:%s805]
      %v807 = vunpack.c.l.bf16 %v806
      %v808 = vunpack.c.h.bf16 %v806
      %s809 = ssub.s32 0, %s33
      %v810 = vstv %s809
      %vm811 = vcmp.lt.s32.totalorder %v810, 0
      %v812 = vsel %vm811, %v11, %v807
      %s813 = smul.addr %s33, 128
      %v814 = vlaneseq
      %v815 = vand.u32 %v814, 127
      %v816 = vstv %s813
      %v817 = vadd.s32 %v815, %v816
      %vm818 = vcmp.lt.s32.totalorder %v817, 36
      %v819 = vsel %vm818, %v812, %v11
      %s820 = scalar_lea.vmem [#allocation13], 60
      %v821 = vpack.c.bf16 0.0, %v819
      %s823 = ssub.s32 16, 1
      %824 = vst [vmem:[%s820] sm:%s823] %v821
      %s825 = scalar_lea.vmem %s274, 64
      %s826 = ssub.s32 0, %s33
      %p827 = scmp.lt.s32.totalorder %s826, 0
      %s828 = scalar_select %p827, 0, 255
      %s829 = sshrl.u32 %s828, 1
      %s830 = sor.u32 %s828, %s829
      %s831 = sand.u32 %s830, 85
      %s832 = sshrl.u32 %s831, 1
      %s833 = sor.u32 %s831, %s832
      %s834 = sand.u32 51, %s833
      %s835 = sshrl.u32 %s834, 2
      %s836 = sor.u32 %s834, %s835
      %s837 = sand.u32 15, %s836
      %v838 = vld [vmem:[%s825] sm:%s837]
      %v839 = vunpack.c.l.bf16 %v838
      %v840 = vunpack.c.h.bf16 %v838
      %s841 = ssub.s32 0, %s33
      %v842 = vstv %s841
      %vm843 = vcmp.lt.s32.totalorder %v842, 0
      %v844 = vsel %vm843, %v11, %v839
      %s845 = smul.addr %s33, 128
      %v846 = vlaneseq
      %v847 = vand.u32 %v846, 127
      %v848 = vstv %s845
      %v849 = vadd.s32 %v847, %v848
      %vm850 = vcmp.lt.s32.totalorder %v849, 36
      %v851 = vsel %vm850, %v844, %v11
      %s852 = scalar_lea.vmem [#allocation13], 64
      %v853 = vpack.c.bf16 0.0, %v851
      %s855 = ssub.s32 16, 1
      %856 = vst [vmem:[%s852] sm:%s855] %v853
      %s857 = scalar_lea.vmem %s274, 68
      %s858 = ssub.s32 0, %s33
      %p859 = scmp.lt.s32.totalorder %s858, 0
      %s860 = scalar_select %p859, 0, 255
      %s861 = sshrl.u32 %s860, 1
      %s862 = sor.u32 %s860, %s861
      %s863 = sand.u32 %s862, 85
      %s864 = sshrl.u32 %s863, 1
      %s865 = sor.u32 %s863, %s864
      %s866 = sand.u32 51, %s865
      %s867 = sshrl.u32 %s866, 2
      %s868 = sor.u32 %s866, %s867
      %s869 = sand.u32 15, %s868
      %v870 = vld [vmem:[%s857] sm:%s869]
      %v871 = vunpack.c.l.bf16 %v870
      %v872 = vunpack.c.h.bf16 %v870
      %s873 = ssub.s32 0, %s33
      %v874 = vstv %s873
      %vm875 = vcmp.lt.s32.totalorder %v874, 0
      %v876 = vsel %vm875, %v11, %v871
      %s877 = smul.addr %s33, 128
      %v878 = vlaneseq
      %v879 = vand.u32 %v878, 127
      %v880 = vstv %s877
      %v881 = vadd.s32 %v879, %v880
      %vm882 = vcmp.lt.s32.totalorder %v881, 36
      %v883 = vsel %vm882, %v876, %v11
      %s884 = scalar_lea.vmem [#allocation13], 68
      %v885 = vpack.c.bf16 0.0, %v883
      %s887 = ssub.s32 16, 1
      %888 = vst [vmem:[%s884] sm:%s887] %v885
      %s889 = scalar_lea.vmem %s274, 72
      %s890 = ssub.s32 0, %s33
      %p891 = scmp.lt.s32.totalorder %s890, 0
      %s892 = scalar_select %p891, 0, 255
      %s893 = sshrl.u32 %s892, 1
      %s894 = sor.u32 %s892, %s893
      %s895 = sand.u32 %s894, 85
      %s896 = sshrl.u32 %s895, 1
      %s897 = sor.u32 %s895, %s896
      %s898 = sand.u32 51, %s897
      %s899 = sshrl.u32 %s898, 2
      %s900 = sor.u32 %s898, %s899
      %s901 = sand.u32 15, %s900
      %v902 = vld [vmem:[%s889] sm:%s901]
      %v903 = vunpack.c.l.bf16 %v902
      %v904 = vunpack.c.h.bf16 %v902
      %s905 = ssub.s32 0, %s33
      %v906 = vstv %s905
      %vm907 = vcmp.lt.s32.totalorder %v906, 0
      %v908 = vsel %vm907, %v11, %v903
      %s909 = smul.addr %s33, 128
      %v910 = vlaneseq
      %v911 = vand.u32 %v910, 127
      %v912 = vstv %s909
      %v913 = vadd.s32 %v911, %v912
      %vm914 = vcmp.lt.s32.totalorder %v913, 36
      %v915 = vsel %vm914, %v908, %v11
      %s916 = scalar_lea.vmem [#allocation13], 72
      %v917 = vpack.c.bf16 0.0, %v915
      %s919 = ssub.s32 16, 1
      %920 = vst [vmem:[%s916] sm:%s919] %v917
      %s921 = scalar_lea.vmem %s274, 76
      %s922 = ssub.s32 0, %s33
      %p923 = scmp.lt.s32.totalorder %s922, 0
      %s924 = scalar_select %p923, 0, 255
      %s925 = sshrl.u32 %s924, 1
      %s926 = sor.u32 %s924, %s925
      %s927 = sand.u32 %s926, 85
      %s928 = sshrl.u32 %s927, 1
      %s929 = sor.u32 %s927, %s928
      %s930 = sand.u32 51, %s929
      %s931 = sshrl.u32 %s930, 2
      %s932 = sor.u32 %s930, %s931
      %s933 = sand.u32 15, %s932
      %v934 = vld [vmem:[%s921] sm:%s933]
      %v935 = vunpack.c.l.bf16 %v934
      %v936 = vunpack.c.h.bf16 %v934
      %s937 = ssub.s32 0, %s33
      %v938 = vstv %s937
      %vm939 = vcmp.lt.s32.totalorder %v938, 0
      %v940 = vsel %vm939, %v11, %v935
      %s941 = smul.addr %s33, 128
      %v942 = vlaneseq
      %v943 = vand.u32 %v942, 127
      %v944 = vstv %s941
      %v945 = vadd.s32 %v943, %v944
      %vm946 = vcmp.lt.s32.totalorder %v945, 36
      %v947 = vsel %vm946, %v940, %v11
      %s948 = scalar_lea.vmem [#allocation13], 76
      %v949 = vpack.c.bf16 0.0, %v947
      %s951 = ssub.s32 16, 1
      %952 = vst [vmem:[%s948] sm:%s951] %v949
      %s953 = scalar_lea.vmem %s274, 80
      %s954 = ssub.s32 0, %s33
      %p955 = scmp.lt.s32.totalorder %s954, 0
      %s956 = scalar_select %p955, 0, 255
      %s957 = sshrl.u32 %s956, 1
      %s958 = sor.u32 %s956, %s957
      %s959 = sand.u32 %s958, 85
      %s960 = sshrl.u32 %s959, 1
      %s961 = sor.u32 %s959, %s960
      %s962 = sand.u32 51, %s961
      %s963 = sshrl.u32 %s962, 2
      %s964 = sor.u32 %s962, %s963
      %s965 = sand.u32 15, %s964
      %v966 = vld [vmem:[%s953] sm:%s965]
      %v967 = vunpack.c.l.bf16 %v966
      %v968 = vunpack.c.h.bf16 %v966
      %s969 = ssub.s32 0, %s33
      %v970 = vstv %s969
      %vm971 = vcmp.lt.s32.totalorder %v970, 0
      %v972 = vsel %vm971, %v11, %v967
      %s973 = smul.addr %s33, 128
      %v974 = vlaneseq
      %v975 = vand.u32 %v974, 127
      %v976 = vstv %s973
      %v977 = vadd.s32 %v975, %v976
      %vm978 = vcmp.lt.s32.totalorder %v977, 36
      %v979 = vsel %vm978, %v972, %v11
      %s980 = scalar_lea.vmem [#allocation13], 80
      %v981 = vpack.c.bf16 0.0, %v979
      %s983 = ssub.s32 16, 1
      %984 = vst [vmem:[%s980] sm:%s983] %v981
      %s985 = scalar_lea.vmem %s274, 84
      %s986 = ssub.s32 0, %s33
      %p987 = scmp.lt.s32.totalorder %s986, 0
      %s988 = scalar_select %p987, 0, 255
      %s989 = sshrl.u32 %s988, 1
      %s990 = sor.u32 %s988, %s989
      %s991 = sand.u32 %s990, 85
      %s992 = sshrl.u32 %s991, 1
      %s993 = sor.u32 %s991, %s992
      %s994 = sand.u32 51, %s993
      %s995 = sshrl.u32 %s994, 2
      %s996 = sor.u32 %s994, %s995
      %s997 = sand.u32 15, %s996
      %v998 = vld [vmem:[%s985] sm:%s997]
      %v999 = vunpack.c.l.bf16 %v998
      %v1000 = vunpack.c.h.bf16 %v998
      %s1001 = ssub.s32 0, %s33
      %v1002 = vstv %s1001
      %vm1003 = vcmp.lt.s32.totalorder %v1002, 0
      %v1004 = vsel %vm1003, %v11, %v999
      %s1005 = smul.addr %s33, 128
      %v1006 = vlaneseq
      %v1007 = vand.u32 %v1006, 127
      %v1008 = vstv %s1005
      %v1009 = vadd.s32 %v1007, %v1008
      %vm1010 = vcmp.lt.s32.totalorder %v1009, 36
      %v1011 = vsel %vm1010, %v1004, %v11
      %s1012 = scalar_lea.vmem [#allocation13], 84
      %v1013 = vpack.c.bf16 0.0, %v1011
      %s1015 = ssub.s32 16, 1
      %1016 = vst [vmem:[%s1012] sm:%s1015] %v1013
      %s1017 = scalar_lea.vmem %s274, 88
      %s1018 = ssub.s32 0, %s33
      %p1019 = scmp.lt.s32.totalorder %s1018, 0
      %s1020 = scalar_select %p1019, 0, 255
      %s1021 = sshrl.u32 %s1020, 1
      %s1022 = sor.u32 %s1020, %s1021
      %s1023 = sand.u32 %s1022, 85
      %s1024 = sshrl.u32 %s1023, 1
      %s1025 = sor.u32 %s1023, %s1024
      %s1026 = sand.u32 51, %s1025
      %s1027 = sshrl.u32 %s1026, 2
      %s1028 = sor.u32 %s1026, %s1027
      %s1029 = sand.u32 15, %s1028
      %v1030 = vld [vmem:[%s1017] sm:%s1029]
      %v1031 = vunpack.c.l.bf16 %v1030
      %v1032 = vunpack.c.h.bf16 %v1030
      %s1033 = ssub.s32 0, %s33
      %v1034 = vstv %s1033
      %vm1035 = vcmp.lt.s32.totalorder %v1034, 0
      %v1036 = vsel %vm1035, %v11, %v1031
      %s1037 = smul.addr %s33, 128
      %v1038 = vlaneseq
      %v1039 = vand.u32 %v1038, 127
      %v1040 = vstv %s1037
      %v1041 = vadd.s32 %v1039, %v1040
      %vm1042 = vcmp.lt.s32.totalorder %v1041, 36
      %v1043 = vsel %vm1042, %v1036, %v11
      %s1044 = scalar_lea.vmem [#allocation13], 88
      %v1045 = vpack.c.bf16 0.0, %v1043
      %s1047 = ssub.s32 16, 1
      %1048 = vst [vmem:[%s1044] sm:%s1047] %v1045
      %s1049 = scalar_lea.vmem %s274, 92
      %s1050 = ssub.s32 0, %s33
      %p1051 = scmp.lt.s32.totalorder %s1050, 0
      %s1052 = scalar_select %p1051, 0, 255
      %s1053 = sshrl.u32 %s1052, 1
      %s1054 = sor.u32 %s1052, %s1053
      %s1055 = sand.u32 %s1054, 85
      %s1056 = sshrl.u32 %s1055, 1
      %s1057 = sor.u32 %s1055, %s1056
      %s1058 = sand.u32 51, %s1057
      %s1059 = sshrl.u32 %s1058, 2
      %s1060 = sor.u32 %s1058, %s1059
      %s1061 = sand.u32 15, %s1060
      %v1062 = vld [vmem:[%s1049] sm:%s1061]
      %v1063 = vunpack.c.l.bf16 %v1062
      %v1064 = vunpack.c.h.bf16 %v1062
      %s1065 = ssub.s32 0, %s33
      %v1066 = vstv %s1065
      %vm1067 = vcmp.lt.s32.totalorder %v1066, 0
      %v1068 = vsel %vm1067, %v11, %v1063
      %s1069 = smul.addr %s33, 128
      %v1070 = vlaneseq
      %v1071 = vand.u32 %v1070, 127
      %v1072 = vstv %s1069
      %v1073 = vadd.s32 %v1071, %v1072
      %vm1074 = vcmp.lt.s32.totalorder %v1073, 36
      %v1075 = vsel %vm1074, %v1068, %v11
      %s1076 = scalar_lea.vmem [#allocation13], 92
      %v1077 = vpack.c.bf16 0.0, %v1075
      %s1079 = ssub.s32 16, 1
      %1080 = vst [vmem:[%s1076] sm:%s1079] %v1077
      %s1081 = scalar_lea.vmem %s274, 96
      %s1082 = ssub.s32 0, %s33
      %p1083 = scmp.lt.s32.totalorder %s1082, 0
      %s1084 = scalar_select %p1083, 0, 255
      %s1085 = sshrl.u32 %s1084, 1
      %s1086 = sor.u32 %s1084, %s1085
      %s1087 = sand.u32 %s1086, 85
      %s1088 = sshrl.u32 %s1087, 1
      %s1089 = sor.u32 %s1087, %s1088
      %s1090 = sand.u32 51, %s1089
      %s1091 = sshrl.u32 %s1090, 2
      %s1092 = sor.u32 %s1090, %s1091
      %s1093 = sand.u32 15, %s1092
      %v1094 = vld [vmem:[%s1081] sm:%s1093]
      %v1095 = vunpack.c.l.bf16 %v1094
      %v1096 = vunpack.c.h.bf16 %v1094
      %s1097 = ssub.s32 0, %s33
      %v1098 = vstv %s1097
      %vm1099 = vcmp.lt.s32.totalorder %v1098, 0
      %v1100 = vsel %vm1099, %v11, %v1095
      %s1101 = smul.addr %s33, 128
      %v1102 = vlaneseq
      %v1103 = vand.u32 %v1102, 127
      %v1104 = vstv %s1101
      %v1105 = vadd.s32 %v1103, %v1104
      %vm1106 = vcmp.lt.s32.totalorder %v1105, 36
      %v1107 = vsel %vm1106, %v1100, %v11
      %s1108 = scalar_lea.vmem [#allocation13], 96
      %v1109 = vpack.c.bf16 0.0, %v1107
      %s1111 = ssub.s32 16, 1
      %1112 = vst [vmem:[%s1108] sm:%s1111] %v1109
      %s1113 = scalar_lea.vmem %s274, 100
      %s1114 = ssub.s32 0, %s33
      %p1115 = scmp.lt.s32.totalorder %s1114, 0
      %s1116 = scalar_select %p1115, 0, 255
      %s1117 = sshrl.u32 %s1116, 1
      %s1118 = sor.u32 %s1116, %s1117
      %s1119 = sand.u32 %s1118, 85
      %s1120 = sshrl.u32 %s1119, 1
      %s1121 = sor.u32 %s1119, %s1120
      %s1122 = sand.u32 51, %s1121
      %s1123 = sshrl.u32 %s1122, 2
      %s1124 = sor.u32 %s1122, %s1123
      %s1125 = sand.u32 15, %s1124
      %v1126 = vld [vmem:[%s1113] sm:%s1125]
      %v1127 = vunpack.c.l.bf16 %v1126
      %v1128 = vunpack.c.h.bf16 %v1126
      %s1129 = ssub.s32 0, %s33
      %v1130 = vstv %s1129
      %vm1131 = vcmp.lt.s32.totalorder %v1130, 0
      %v1132 = vsel %vm1131, %v11, %v1127
      %s1133 = smul.addr %s33, 128
      %v1134 = vlaneseq
      %v1135 = vand.u32 %v1134, 127
      %v1136 = vstv %s1133
      %v1137 = vadd.s32 %v1135, %v1136
      %vm1138 = vcmp.lt.s32.totalorder %v1137, 36
      %v1139 = vsel %vm1138, %v1132, %v11
      %s1140 = scalar_lea.vmem [#allocation13], 100
      %v1141 = vpack.c.bf16 0.0, %v1139
      %s1143 = ssub.s32 16, 1
      %1144 = vst [vmem:[%s1140] sm:%s1143] %v1141
      %s1145 = scalar_lea.vmem %s274, 104
      %s1146 = ssub.s32 0, %s33
      %p1147 = scmp.lt.s32.totalorder %s1146, 0
      %s1148 = scalar_select %p1147, 0, 255
      %s1149 = sshrl.u32 %s1148, 1
      %s1150 = sor.u32 %s1148, %s1149
      %s1151 = sand.u32 %s1150, 85
      %s1152 = sshrl.u32 %s1151, 1
      %s1153 = sor.u32 %s1151, %s1152
      %s1154 = sand.u32 51, %s1153
      %s1155 = sshrl.u32 %s1154, 2
      %s1156 = sor.u32 %s1154, %s1155
      %s1157 = sand.u32 15, %s1156
      %v1158 = vld [vmem:[%s1145] sm:%s1157]
      %v1159 = vunpack.c.l.bf16 %v1158
      %v1160 = vunpack.c.h.bf16 %v1158
      %s1161 = ssub.s32 0, %s33
      %v1162 = vstv %s1161
      %vm1163 = vcmp.lt.s32.totalorder %v1162, 0
      %v1164 = vsel %vm1163, %v11, %v1159
      %s1165 = smul.addr %s33, 128
      %v1166 = vlaneseq
      %v1167 = vand.u32 %v1166, 127
      %v1168 = vstv %s1165
      %v1169 = vadd.s32 %v1167, %v1168
      %vm1170 = vcmp.lt.s32.totalorder %v1169, 36
      %v1171 = vsel %vm1170, %v1164, %v11
      %s1172 = scalar_lea.vmem [#allocation13], 104
      %v1173 = vpack.c.bf16 0.0, %v1171
      %s1175 = ssub.s32 16, 1
      %1176 = vst [vmem:[%s1172] sm:%s1175] %v1173
      %s1177 = scalar_lea.vmem %s274, 108
      %s1178 = ssub.s32 0, %s33
      %p1179 = scmp.lt.s32.totalorder %s1178, 0
      %s1180 = scalar_select %p1179, 0, 255
      %s1181 = sshrl.u32 %s1180, 1
      %s1182 = sor.u32 %s1180, %s1181
      %s1183 = sand.u32 %s1182, 85
      %s1184 = sshrl.u32 %s1183, 1
      %s1185 = sor.u32 %s1183, %s1184
      %s1186 = sand.u32 51, %s1185
      %s1187 = sshrl.u32 %s1186, 2
      %s1188 = sor.u32 %s1186, %s1187
      %s1189 = sand.u32 15, %s1188
      %v1190 = vld [vmem:[%s1177] sm:%s1189]
      %v1191 = vunpack.c.l.bf16 %v1190
      %v1192 = vunpack.c.h.bf16 %v1190
      %s1193 = ssub.s32 0, %s33
      %v1194 = vstv %s1193
      %vm1195 = vcmp.lt.s32.totalorder %v1194, 0
      %v1196 = vsel %vm1195, %v11, %v1191
      %s1197 = smul.addr %s33, 128
      %v1198 = vlaneseq
      %v1199 = vand.u32 %v1198, 127
      %v1200 = vstv %s1197
      %v1201 = vadd.s32 %v1199, %v1200
      %vm1202 = vcmp.lt.s32.totalorder %v1201, 36
      %v1203 = vsel %vm1202, %v1196, %v11
      %s1204 = scalar_lea.vmem [#allocation13], 108
      %v1205 = vpack.c.bf16 0.0, %v1203
      %s1207 = ssub.s32 16, 1
      %1208 = vst [vmem:[%s1204] sm:%s1207] %v1205
      %s1209 = scalar_lea.vmem %s274, 112
      %s1210 = ssub.s32 0, %s33
      %p1211 = scmp.lt.s32.totalorder %s1210, 0
      %s1212 = scalar_select %p1211, 0, 255
      %s1213 = sshrl.u32 %s1212, 1
      %s1214 = sor.u32 %s1212, %s1213
      %s1215 = sand.u32 %s1214, 85
      %s1216 = sshrl.u32 %s1215, 1
      %s1217 = sor.u32 %s1215, %s1216
      %s1218 = sand.u32 51, %s1217
      %s1219 = sshrl.u32 %s1218, 2
      %s1220 = sor.u32 %s1218, %s1219
      %s1221 = sand.u32 15, %s1220
      %v1222 = vld [vmem:[%s1209] sm:%s1221]
      %v1223 = vunpack.c.l.bf16 %v1222
      %v1224 = vunpack.c.h.bf16 %v1222
      %s1225 = ssub.s32 0, %s33
      %v1226 = vstv %s1225
      %vm1227 = vcmp.lt.s32.totalorder %v1226, 0
      %v1228 = vsel %vm1227, %v11, %v1223
      %s1229 = smul.addr %s33, 128
      %v1230 = vlaneseq
      %v1231 = vand.u32 %v1230, 127
      %v1232 = vstv %s1229
      %v1233 = vadd.s32 %v1231, %v1232
      %vm1234 = vcmp.lt.s32.totalorder %v1233, 36
      %v1235 = vsel %vm1234, %v1228, %v11
      %s1236 = scalar_lea.vmem [#allocation13], 112
      %v1237 = vpack.c.bf16 0.0, %v1235
      %s1239 = ssub.s32 16, 1
      %1240 = vst [vmem:[%s1236] sm:%s1239] %v1237
      %s1241 = scalar_lea.vmem %s274, 116
      %s1242 = ssub.s32 0, %s33
      %p1243 = scmp.lt.s32.totalorder %s1242, 0
      %s1244 = scalar_select %p1243, 0, 255
      %s1245 = sshrl.u32 %s1244, 1
      %s1246 = sor.u32 %s1244, %s1245
      %s1247 = sand.u32 %s1246, 85
      %s1248 = sshrl.u32 %s1247, 1
      %s1249 = sor.u32 %s1247, %s1248
      %s1250 = sand.u32 51, %s1249
      %s1251 = sshrl.u32 %s1250, 2
      %s1252 = sor.u32 %s1250, %s1251
      %s1253 = sand.u32 15, %s1252
      %v1254 = vld [vmem:[%s1241] sm:%s1253]
      %v1255 = vunpack.c.l.bf16 %v1254
      %v1256 = vunpack.c.h.bf16 %v1254
      %s1257 = ssub.s32 0, %s33
      %v1258 = vstv %s1257
      %vm1259 = vcmp.lt.s32.totalorder %v1258, 0
      %v1260 = vsel %vm1259, %v11, %v1255
      %s1261 = smul.addr %s33, 128
      %v1262 = vlaneseq
      %v1263 = vand.u32 %v1262, 127
      %v1264 = vstv %s1261
      %v1265 = vadd.s32 %v1263, %v1264
      %vm1266 = vcmp.lt.s32.totalorder %v1265, 36
      %v1267 = vsel %vm1266, %v1260, %v11
      %s1268 = scalar_lea.vmem [#allocation13], 116
      %v1269 = vpack.c.bf16 0.0, %v1267
      %s1271 = ssub.s32 16, 1
      %1272 = vst [vmem:[%s1268] sm:%s1271] %v1269
      %s1273 = scalar_lea.vmem %s274, 120
      %s1274 = ssub.s32 0, %s33
      %p1275 = scmp.lt.s32.totalorder %s1274, 0
      %s1276 = scalar_select %p1275, 0, 255
      %s1277 = sshrl.u32 %s1276, 1
      %s1278 = sor.u32 %s1276, %s1277
      %s1279 = sand.u32 %s1278, 85
      %s1280 = sshrl.u32 %s1279, 1
      %s1281 = sor.u32 %s1279, %s1280
      %s1282 = sand.u32 51, %s1281
      %s1283 = sshrl.u32 %s1282, 2
      %s1284 = sor.u32 %s1282, %s1283
      %s1285 = sand.u32 15, %s1284
      %v1286 = vld [vmem:[%s1273] sm:%s1285]
      %v1287 = vunpack.c.l.bf16 %v1286
      %v1288 = vunpack.c.h.bf16 %v1286
      %s1289 = ssub.s32 0, %s33
      %v1290 = vstv %s1289
      %vm1291 = vcmp.lt.s32.totalorder %v1290, 0
      %v1292 = vsel %vm1291, %v11, %v1287
      %s1293 = smul.addr %s33, 128
      %v1294 = vlaneseq
      %v1295 = vand.u32 %v1294, 127
      %v1296 = vstv %s1293
      %v1297 = vadd.s32 %v1295, %v1296
      %vm1298 = vcmp.lt.s32.totalorder %v1297, 36
      %v1299 = vsel %vm1298, %v1292, %v11
      %s1300 = scalar_lea.vmem [#allocation13], 120
      %v1301 = vpack.c.bf16 0.0, %v1299
      %s1303 = ssub.s32 16, 1
      %1304 = vst [vmem:[%s1300] sm:%s1303] %v1301
      %s1305 = scalar_lea.vmem %s274, 124
      %s1306 = ssub.s32 0, %s33
      %p1307 = scmp.lt.s32.totalorder %s1306, 0
      %s1308 = scalar_select %p1307, 0, 255
      %s1309 = sshrl.u32 %s1308, 1
      %s1310 = sor.u32 %s1308, %s1309
      %s1311 = sand.u32 %s1310, 85
      %s1312 = sshrl.u32 %s1311, 1
      %s1313 = sor.u32 %s1311, %s1312
      %s1314 = sand.u32 51, %s1313
      %s1315 = sshrl.u32 %s1314, 2
      %s1316 = sor.u32 %s1314, %s1315
      %s1317 = sand.u32 15, %s1316
      %v1318 = vld [vmem:[%s1305] sm:%s1317]
      %v1319 = vunpack.c.l.bf16 %v1318
      %v1320 = vunpack.c.h.bf16 %v1318
      %s1321 = ssub.s32 0, %s33
      %v1322 = vstv %s1321
      %vm1323 = vcmp.lt.s32.totalorder %v1322, 0
      %v1324 = vsel %vm1323, %v11, %v1319
      %s1325 = smul.addr %s33, 128
      %v1326 = vlaneseq
      %v1327 = vand.u32 %v1326, 127
      %v1328 = vstv %s1325
      %v1329 = vadd.s32 %v1327, %v1328
      %vm1330 = vcmp.lt.s32.totalorder %v1329, 36
      %v1331 = vsel %vm1330, %v1324, %v11
      %s1332 = scalar_lea.vmem [#allocation13], 124
      %v1333 = vpack.c.bf16 0.0, %v1331
      %s1335 = ssub.s32 16, 1
      %1336 = vst [vmem:[%s1332] sm:%s1335] %v1333
      %s1337 = ssub.s32 4, %s292
      %s1338 = ssub.s32 0, %s32
      %s1339 = sor.u32 %s1337, %s1338
      %p1340 = scmp.lt.s32.totalorder %s1339, 0
      %s1341 = scalar_select %p1340, 0, 255
      %s1342 = sshrl.u32 %s1341, 1
      %s1343 = sor.u32 %s1341, %s1342
      %s1344 = sand.u32 %s1343, 85
      %s1345 = sshrl.u32 %s1344, 1
      %s1346 = sor.u32 %s1344, %s1345
      %s1347 = sand.u32 51, %s1346
      %s1348 = sshrl.u32 %s1347, 2
      %s1349 = sor.u32 %s1347, %s1348
      %s1350 = sand.u32 15, %s1349
      %v1351 = vld [vmem:[%s291] sm:%s1350]
      %v1352 = vunpack.c.l.bf16 %v1351
      %v1353 = vunpack.c.h.bf16 %v1351
      %s1354 = ssub.s32 4, %s292
      %s1355 = ssub.s32 0, %s32
      %s1356 = sor.u32 %s1354, %s1355
      %v1357 = vstv %s1356
      %vm1358 = vcmp.lt.s32.totalorder %v1357, 0
      %v1359 = vsel %vm1358, %v16, %v1352
      %s1360 = smul.addr %s292, 8
      %v1361 = vlaneseq
      %v1362 = vshrl.u32 %v1361, 7
      %v1363 = vstv %s1360
      %v1364 = vadd.s32 %v1362, %v1363
      %vm1365 = vcmp.lt.s32.totalorder %v1364, 36
      %v1366 = vsel %vm1365, %v1359, %v16
      %s1367 = smul.addr %s32, 128
      %v1368 = vlaneseq
      %v1369 = vand.u32 %v1368, 127
      %v1370 = vstv %s1367
      %v1371 = vadd.s32 %v1369, %v1370
      %vm1372 = vcmp.lt.s32.totalorder %v1371, 8
      %v1373 = vsel %vm1372, %v1366, %v16
      %v1374 = vpack.c.bf16 0.0, %v1373
      %s1376 = ssub.s32 16, 1
      %1377 = vst [vmem:[#allocation14] sm:%s1376] %v1374
      %s1378 = scalar_lea.vmem %s291, 4
      %s1379 = sadd.s32 %s292, 1
      %s1380 = ssub.s32 4, %s1379
      %s1381 = ssub.s32 0, %s32
      %s1382 = sor.u32 %s1380, %s1381
      %p1383 = scmp.lt.s32.totalorder %s1382, 0
      %s1384 = scalar_select %p1383, 0, 255
      %s1385 = sshrl.u32 %s1384, 1
      %s1386 = sor.u32 %s1384, %s1385
      %s1387 = sand.u32 %s1386, 85
      %s1388 = sshrl.u32 %s1387, 1
      %s1389 = sor.u32 %s1387, %s1388
      %s1390 = sand.u32 51, %s1389
      %s1391 = sshrl.u32 %s1390, 2
      %s1392 = sor.u32 %s1390, %s1391
      %s1393 = sand.u32 15, %s1392
      %v1394 = vld [vmem:[%s1378] sm:%s1393]
      %v1395 = vunpack.c.l.bf16 %v1394
      %v1396 = vunpack.c.h.bf16 %v1394
      %s1397 = sadd.s32 %s292, 1
      %s1398 = ssub.s32 4, %s1397
      %s1399 = ssub.s32 0, %s32
      %s1400 = sor.u32 %s1398, %s1399
      %v1401 = vstv %s1400
      %vm1402 = vcmp.lt.s32.totalorder %v1401, 0
      %v1403 = vsel %vm1402, %v16, %v1395
      %s1404 = sadd.s32 %s292, 1
      %s1405 = smul.addr %s1404, 8
      %v1406 = vlaneseq
      %v1407 = vshrl.u32 %v1406, 7
      %v1408 = vstv %s1405
      %v1409 = vadd.s32 %v1407, %v1408
      %vm1410 = vcmp.lt.s32.totalorder %v1409, 36
      %v1411 = vsel %vm1410, %v1403, %v16
      %s1412 = smul.addr %s32, 128
      %v1413 = vlaneseq
      %v1414 = vand.u32 %v1413, 127
      %v1415 = vstv %s1412
      %v1416 = vadd.s32 %v1414, %v1415
      %vm1417 = vcmp.lt.s32.totalorder %v1416, 8
      %v1418 = vsel %vm1417, %v1411, %v16
      %s1419 = scalar_lea.vmem [#allocation14], 4
      %v1420 = vpack.c.bf16 0.0, %v1418
      %s1422 = ssub.s32 16, 1
      %1423 = vst [vmem:[%s1419] sm:%s1422] %v1420
      %s1424 = scalar_lea.vmem %s291, 8
      %s1425 = sadd.s32 %s292, 2
      %s1426 = ssub.s32 4, %s1425
      %s1427 = ssub.s32 0, %s32
      %s1428 = sor.u32 %s1426, %s1427
      %p1429 = scmp.lt.s32.totalorder %s1428, 0
      %s1430 = scalar_select %p1429, 0, 255
      %s1431 = sshrl.u32 %s1430, 1
      %s1432 = sor.u32 %s1430, %s1431
      %s1433 = sand.u32 %s1432, 85
      %s1434 = sshrl.u32 %s1433, 1
      %s1435 = sor.u32 %s1433, %s1434
      %s1436 = sand.u32 51, %s1435
      %s1437 = sshrl.u32 %s1436, 2
      %s1438 = sor.u32 %s1436, %s1437
      %s1439 = sand.u32 15, %s1438
      %v1440 = vld [vmem:[%s1424] sm:%s1439]
      %v1441 = vunpack.c.l.bf16 %v1440
      %v1442 = vunpack.c.h.bf16 %v1440
      %s1443 = sadd.s32 %s292, 2
      %s1444 = ssub.s32 4, %s1443
      %s1445 = ssub.s32 0, %s32
      %s1446 = sor.u32 %s1444, %s1445
      %v1447 = vstv %s1446
      %vm1448 = vcmp.lt.s32.totalorder %v1447, 0
      %v1449 = vsel %vm1448, %v16, %v1441
      %s1450 = sadd.s32 %s292, 2
      %s1451 = smul.addr %s1450, 8
      %v1452 = vlaneseq
      %v1453 = vshrl.u32 %v1452, 7
      %v1454 = vstv %s1451
      %v1455 = vadd.s32 %v1453, %v1454
      %vm1456 = vcmp.lt.s32.totalorder %v1455, 36
      %v1457 = vsel %vm1456, %v1449, %v16
      %s1458 = smul.addr %s32, 128
      %v1459 = vlaneseq
      %v1460 = vand.u32 %v1459, 127
      %v1461 = vstv %s1458
      %v1462 = vadd.s32 %v1460, %v1461
      %vm1463 = vcmp.lt.s32.totalorder %v1462, 8
      %v1464 = vsel %vm1463, %v1457, %v16
      %s1465 = scalar_lea.vmem [#allocation14], 8
      %v1466 = vpack.c.bf16 0.0, %v1464
      %s1468 = ssub.s32 16, 1
      %1469 = vst [vmem:[%s1465] sm:%s1468] %v1466
      %s1470 = scalar_lea.vmem %s291, 12
      %s1471 = sadd.s32 %s292, 3
      %s1472 = ssub.s32 4, %s1471
      %s1473 = ssub.s32 0, %s32
      %s1474 = sor.u32 %s1472, %s1473
      %p1475 = scmp.lt.s32.totalorder %s1474, 0
      %s1476 = scalar_select %p1475, 0, 255
      %s1477 = sshrl.u32 %s1476, 1
      %s1478 = sor.u32 %s1476, %s1477
      %s1479 = sand.u32 %s1478, 85
      %s1480 = sshrl.u32 %s1479, 1
      %s1481 = sor.u32 %s1479, %s1480
      %s1482 = sand.u32 51, %s1481
      %s1483 = sshrl.u32 %s1482, 2
      %s1484 = sor.u32 %s1482, %s1483
      %s1485 = sand.u32 15, %s1484
      %v1486 = vld [vmem:[%s1470] sm:%s1485]
      %v1487 = vunpack.c.l.bf16 %v1486
      %v1488 = vunpack.c.h.bf16 %v1486
      %s1489 = sadd.s32 %s292, 3
      %s1490 = ssub.s32 4, %s1489
      %s1491 = ssub.s32 0, %s32
      %s1492 = sor.u32 %s1490, %s1491
      %v1493 = vstv %s1492
      %vm1494 = vcmp.lt.s32.totalorder %v1493, 0
      %v1495 = vsel %vm1494, %v16, %v1487
      %s1496 = sadd.s32 %s292, 3
      %s1497 = smul.addr %s1496, 8
      %v1498 = vlaneseq
      %v1499 = vshrl.u32 %v1498, 7
      %v1500 = vstv %s1497
      %v1501 = vadd.s32 %v1499, %v1500
      %vm1502 = vcmp.lt.s32.totalorder %v1501, 36
      %v1503 = vsel %vm1502, %v1495, %v16
      %s1504 = smul.addr %s32, 128
      %v1505 = vlaneseq
      %v1506 = vand.u32 %v1505, 127
      %v1507 = vstv %s1504
      %v1508 = vadd.s32 %v1506, %v1507
      %vm1509 = vcmp.lt.s32.totalorder %v1508, 8
      %v1510 = vsel %vm1509, %v1503, %v16
      %s1511 = scalar_lea.vmem [#allocation14], 12
      %v1512 = vpack.c.bf16 0.0, %v1510
      %s1514 = ssub.s32 16, 1
      %1515 = vst [vmem:[%s1511] sm:%s1514] %v1512
      %s1516 = scalar_lea.vmem %s291, 16
      %s1517 = sadd.s32 %s292, 4
      %s1518 = ssub.s32 4, %s1517
      %s1519 = ssub.s32 0, %s32
      %s1520 = sor.u32 %s1518, %s1519
      %p1521 = scmp.lt.s32.totalorder %s1520, 0
      %s1522 = scalar_select %p1521, 0, 255
      %s1523 = sshrl.u32 %s1522, 1
      %s1524 = sor.u32 %s1522, %s1523
      %s1525 = sand.u32 %s1524, 85
      %s1526 = sshrl.u32 %s1525, 1
      %s1527 = sor.u32 %s1525, %s1526
      %s1528 = sand.u32 51, %s1527
      %s1529 = sshrl.u32 %s1528, 2
      %s1530 = sor.u32 %s1528, %s1529
      %s1531 = sand.u32 15, %s1530
      %v1532 = vld [vmem:[%s1516] sm:%s1531]
      %v1533 = vunpack.c.l.bf16 %v1532
      %v1534 = vunpack.c.h.bf16 %v1532
      %s1535 = sadd.s32 %s292, 4
      %s1536 = ssub.s32 4, %s1535
      %s1537 = ssub.s32 0, %s32
      %s1538 = sor.u32 %s1536, %s1537
      %v1539 = vstv %s1538
      %vm1540 = vcmp.lt.s32.totalorder %v1539, 0
      %v1541 = vsel %vm1540, %v16, %v1533
      %s1542 = sadd.s32 %s292, 4
      %s1543 = smul.addr %s1542, 8
      %v1544 = vlaneseq
      %v1545 = vshrl.u32 %v1544, 7
      %v1546 = vstv %s1543
      %v1547 = vadd.s32 %v1545, %v1546
      %vm1548 = vcmp.lt.s32.totalorder %v1547, 36
      %v1549 = vsel %vm1548, %v1541, %v16
      %s1550 = smul.addr %s32, 128
      %v1551 = vlaneseq
      %v1552 = vand.u32 %v1551, 127
      %v1553 = vstv %s1550
      %v1554 = vadd.s32 %v1552, %v1553
      %vm1555 = vcmp.lt.s32.totalorder %v1554, 8
      %v1556 = vsel %vm1555, %v1549, %v16
      %s1557 = scalar_lea.vmem [#allocation14], 16
      %v1558 = vpack.c.bf16 0.0, %v1556
      %s1560 = ssub.s32 16, 1
      %1561 = vst [vmem:[%s1557] sm:%s1560] %v1558
      %s1562 = scalar_lea.vmem [#allocation14], 20
      %v1563 = vpack.c.bf16 0.0, %v16
      %s1565 = ssub.s32 16, 1
      %1566 = vst [vmem:[%s1562] sm:%s1565] %v1563
      %s1567 = scalar_lea.vmem [#allocation14], 24
      %v1568 = vpack.c.bf16 0.0, %v16
      %s1570 = ssub.s32 16, 1
      %1571 = vst [vmem:[%s1567] sm:%s1570] %v1568
      %s1572 = scalar_lea.vmem [#allocation14], 28
      %v1573 = vpack.c.bf16 0.0, %v16
      %s1575 = ssub.s32 16, 1
      %1576 = vst [vmem:[%s1572] sm:%s1575] %v1573
      %s1577 = scalar_lea.vmem [#allocation14], 32
      %v1578 = vpack.c.bf16 0.0, %v16
      %s1580 = ssub.s32 16, 1
      %1581 = vst [vmem:[%s1577] sm:%s1580] %v1578
      %s1582 = scalar_lea.vmem [#allocation14], 36
      %v1583 = vpack.c.bf16 0.0, %v16
      %s1585 = ssub.s32 16, 1
      %1586 = vst [vmem:[%s1582] sm:%s1585] %v1583
      %s1587 = scalar_lea.vmem [#allocation14], 40
      %v1588 = vpack.c.bf16 0.0, %v16
      %s1590 = ssub.s32 16, 1
      %1591 = vst [vmem:[%s1587] sm:%s1590] %v1588
      %s1592 = scalar_lea.vmem [#allocation14], 44
      %v1593 = vpack.c.bf16 0.0, %v16
      %s1595 = ssub.s32 16, 1
      %1596 = vst [vmem:[%s1592] sm:%s1595] %v1593
      %s1597 = scalar_lea.vmem [#allocation14], 48
      %v1598 = vpack.c.bf16 0.0, %v16
      %s1600 = ssub.s32 16, 1
      %1601 = vst [vmem:[%s1597] sm:%s1600] %v1598
      %s1602 = scalar_lea.vmem [#allocation14], 52
      %v1603 = vpack.c.bf16 0.0, %v16
      %s1605 = ssub.s32 16, 1
      %1606 = vst [vmem:[%s1602] sm:%s1605] %v1603
      %s1607 = scalar_lea.vmem [#allocation14], 56
      %v1608 = vpack.c.bf16 0.0, %v16
      %s1610 = ssub.s32 16, 1
      %1611 = vst [vmem:[%s1607] sm:%s1610] %v1608
      %s1612 = scalar_lea.vmem [#allocation14], 60
      %v1613 = vpack.c.bf16 0.0, %v16
      %s1615 = ssub.s32 16, 1
      %1616 = vst [vmem:[%s1612] sm:%s1615] %v1613
      %p1618 = scmp.eq.s32.totalorder %s33, 0
      // Predicated region
      $region29: #{cnn_block_forward.4} parent=27 // pred_check
        %p1619 = pneg %p1618
      $region30: #{cnn_block_forward.4} parent=27 // pred_check_branch
        %1621 = sbr.rel (%p1619) target = $region32
      $region31: #{cnn_block_forward.4} parent=27 // pred_region
        %1622 = vst [vmem:[#allocation2] sm:$0xff] 0.0
        %1623 = vst [vmem:[#allocation2 + $0x8] sm:$0xff] 0.0
        %1624 = vst [vmem:[#allocation2 + $0x10] sm:$0xff] 0.0
        %1625 = vst [vmem:[#allocation2 + $0x18] sm:$0xff] 0.0
        %1626 = vst [vmem:[#allocation2 + $0x20] sm:$0xff] 0.0
        %1627 = vst [vmem:[#allocation2 + $0x28] sm:$0xff] 0.0
        %1628 = vst [vmem:[#allocation2 + $0x30] sm:$0xff] 0.0
        %1629 = vst [vmem:[#allocation2 + $0x38] sm:$0xff] 0.0
        %1630 = vst [vmem:[#allocation2 + $0x40] sm:$0xff] 0.0
        %1631 = vst [vmem:[#allocation2 + $0x48] sm:$0xff] 0.0
        %1632 = vst [vmem:[#allocation2 + $0x50] sm:$0xff] 0.0
        %1633 = vst [vmem:[#allocation2 + $0x58] sm:$0xff] 0.0
        %1634 = vst [vmem:[#allocation2 + $0x60] sm:$0xff] 0.0
        %1635 = vst [vmem:[#allocation2 + $0x68] sm:$0xff] 0.0
        %1636 = vst [vmem:[#allocation2 + $0x70] sm:$0xff] 0.0
        %1637 = vst [vmem:[#allocation2 + $0x78] sm:$0xff] 0.0
        %1638 = vst [vmem:[#allocation2 + $0x80] sm:$0xff] 0.0
        %1639 = vst [vmem:[#allocation2 + $0x88] sm:$0xff] 0.0
        %1640 = vst [vmem:[#allocation2 + $0x90] sm:$0xff] 0.0
        %1641 = vst [vmem:[#allocation2 + $0x98] sm:$0xff] 0.0
        %1642 = vst [vmem:[#allocation2 + $0xa0] sm:$0xff] 0.0
        %1643 = vst [vmem:[#allocation2 + $0xa8] sm:$0xff] 0.0
        %1644 = vst [vmem:[#allocation2 + $0xb0] sm:$0xff] 0.0
        %1645 = vst [vmem:[#allocation2 + $0xb8] sm:$0xff] 0.0
        %1646 = vst [vmem:[#allocation2 + $0xc0] sm:$0xff] 0.0
        %1647 = vst [vmem:[#allocation2 + $0xc8] sm:$0xff] 0.0
        %1648 = vst [vmem:[#allocation2 + $0xd0] sm:$0xff] 0.0
        %1649 = vst [vmem:[#allocation2 + $0xd8] sm:$0xff] 0.0
        %1650 = vst [vmem:[#allocation2 + $0xe0] sm:$0xff] 0.0
        %1651 = vst [vmem:[#allocation2 + $0xe8] sm:$0xff] 0.0
        %1652 = vst [vmem:[#allocation2 + $0xf0] sm:$0xff] 0.0
        %1653 = vst [vmem:[#allocation2 + $0xf8] sm:$0xff] 0.0
      $region32: #{cnn_block_forward.4} parent=27 // pred_fallthru
        _
      %v1654 = vld [vmem:[#allocation2] sm:$0xff]
      %v1655 = vld [vmem:[#allocation2 + $0x8] sm:$0xff]
      %v1656 = vld [vmem:[#allocation2 + $0x10] sm:$0xff]
      %v1657 = vld [vmem:[#allocation2 + $0x18] sm:$0xff]
      %v1658 = vld [vmem:[#allocation2 + $0x20] sm:$0xff]
      %v1659 = vld [vmem:[#allocation2 + $0x28] sm:$0xff]
      %v1660 = vld [vmem:[#allocation2 + $0x30] sm:$0xff]
      %v1661 = vld [vmem:[#allocation2 + $0x38] sm:$0xff]
      %v1662 = vld [vmem:[#allocation2 + $0x40] sm:$0xff]
      %v1663 = vld [vmem:[#allocation2 + $0x48] sm:$0xff]
      %v1664 = vld [vmem:[#allocation2 + $0x50] sm:$0xff]
      %v1665 = vld [vmem:[#allocation2 + $0x58] sm:$0xff]
      %v1666 = vld [vmem:[#allocation2 + $0x60] sm:$0xff]
      %v1667 = vld [vmem:[#allocation2 + $0x68] sm:$0xff]
      %v1668 = vld [vmem:[#allocation2 + $0x70] sm:$0xff]
      %v1669 = vld [vmem:[#allocation2 + $0x78] sm:$0xff]
      %v1670 = vld [vmem:[#allocation2 + $0x80] sm:$0xff]
      %v1671 = vld [vmem:[#allocation2 + $0x88] sm:$0xff]
      %v1672 = vld [vmem:[#allocation2 + $0x90] sm:$0xff]
      %v1673 = vld [vmem:[#allocation2 + $0x98] sm:$0xff]
      %v1674 = vld [vmem:[#allocation2 + $0xa0] sm:$0xff]
      %v1675 = vld [vmem:[#allocation2 + $0xa8] sm:$0xff]
      %v1676 = vld [vmem:[#allocation2 + $0xb0] sm:$0xff]
      %v1677 = vld [vmem:[#allocation2 + $0xb8] sm:$0xff]
      %v1678 = vld [vmem:[#allocation2 + $0xc0] sm:$0xff]
      %v1679 = vld [vmem:[#allocation2 + $0xc8] sm:$0xff]
      %v1680 = vld [vmem:[#allocation2 + $0xd0] sm:$0xff]
      %v1681 = vld [vmem:[#allocation2 + $0xd8] sm:$0xff]
      %v1682 = vld [vmem:[#allocation2 + $0xe0] sm:$0xff]
      %v1683 = vld [vmem:[#allocation2 + $0xe8] sm:$0xff]
      %v1684 = vld [vmem:[#allocation2 + $0xf0] sm:$0xff]
      %v1685 = vld [vmem:[#allocation2 + $0xf8] sm:$0xff]
      %v1686 = vld [vmem:[#allocation13] sm:$0xf]
      %v1687 = vld [vmem:[#allocation13 + $0x4] sm:$0xf]
      %v1688 = vld [vmem:[#allocation13 + $0x8] sm:$0xf]
      %v1689 = vld [vmem:[#allocation13 + $0xc] sm:$0xf]
      %v1690 = vld [vmem:[#allocation13 + $0x10] sm:$0xf]
      %v1691 = vld [vmem:[#allocation13 + $0x14] sm:$0xf]
      %v1692 = vld [vmem:[#allocation13 + $0x18] sm:$0xf]
      %v1693 = vld [vmem:[#allocation13 + $0x1c] sm:$0xf]
      %v1694 = vld [vmem:[#allocation13 + $0x20] sm:$0xf]
      %v1695 = vld [vmem:[#allocation13 + $0x24] sm:$0xf]
      %v1696 = vld [vmem:[#allocation13 + $0x28] sm:$0xf]
      %v1697 = vld [vmem:[#allocation13 + $0x2c] sm:$0xf]
      %v1698 = vld [vmem:[#allocation13 + $0x30] sm:$0xf]
      %v1699 = vld [vmem:[#allocation13 + $0x34] sm:$0xf]
      %v1700 = vld [vmem:[#allocation13 + $0x38] sm:$0xf]
      %v1701 = vld [vmem:[#allocation13 + $0x3c] sm:$0xf]
      %v1702 = vld [vmem:[#allocation13 + $0x40] sm:$0xf]
      %v1703 = vld [vmem:[#allocation13 + $0x44] sm:$0xf]
      %v1704 = vld [vmem:[#allocation13 + $0x48] sm:$0xf]
      %v1705 = vld [vmem:[#allocation13 + $0x4c] sm:$0xf]
      %v1706 = vld [vmem:[#allocation13 + $0x50] sm:$0xf]
      %v1707 = vld [vmem:[#allocation13 + $0x54] sm:$0xf]
      %v1708 = vld [vmem:[#allocation13 + $0x58] sm:$0xf]
      %v1709 = vld [vmem:[#allocation13 + $0x5c] sm:$0xf]
      %v1710 = vld [vmem:[#allocation13 + $0x60] sm:$0xf]
      %v1711 = vld [vmem:[#allocation13 + $0x64] sm:$0xf]
      %v1712 = vld [vmem:[#allocation13 + $0x68] sm:$0xf]
      %v1713 = vld [vmem:[#allocation13 + $0x6c] sm:$0xf]
      %v1714 = vld [vmem:[#allocation13 + $0x70] sm:$0xf]
      %v1715 = vld [vmem:[#allocation13 + $0x74] sm:$0xf]
      %v1716 = vld [vmem:[#allocation13 + $0x78] sm:$0xf]
      %v1717 = vld [vmem:[#allocation13 + $0x7c] sm:$0xf]
      %v1718 = vld [vmem:[#allocation14] sm:$0xf]
      %v1719 = vld [vmem:[#allocation14 + $0x4] sm:$0xf]
      %v1720 = vld [vmem:[#allocation14 + $0x8] sm:$0xf]
      %v1721 = vld [vmem:[#allocation14 + $0xc] sm:$0xf]
      %v1722 = vld [vmem:[#allocation14 + $0x10] sm:$0xf]
      %v1723 = vld [vmem:[#allocation14 + $0x14] sm:$0xf]
      %v1724 = vld [vmem:[#allocation14 + $0x18] sm:$0xf]
      %v1725 = vld [vmem:[#allocation14 + $0x1c] sm:$0xf]
      %v1726 = vld [vmem:[#allocation14 + $0x20] sm:$0xf]
      %v1727 = vld [vmem:[#allocation14 + $0x24] sm:$0xf]
      %v1728 = vld [vmem:[#allocation14 + $0x28] sm:$0xf]
      %v1729 = vld [vmem:[#allocation14 + $0x2c] sm:$0xf]
      %v1730 = vld [vmem:[#allocation14 + $0x30] sm:$0xf]
      %v1731 = vld [vmem:[#allocation14 + $0x34] sm:$0xf]
      %v1732 = vld [vmem:[#allocation14 + $0x38] sm:$0xf]
      %v1733 = vld [vmem:[#allocation14 + $0x3c] sm:$0xf]
      %v1766 = vunpack.c.l.b16 %v1686
      %v1767 = vunpack.c.l.b16 %v1687
      %v1768 = vunpack.c.l.b16 %v1688
      %v1769 = vunpack.c.l.b16 %v1689
      %v1770 = vunpack.c.l.b16 %v1690
      %v1771 = vunpack.c.l.b16 %v1691
      %v1772 = vunpack.c.l.b16 %v1692
      %v1773 = vunpack.c.l.b16 %v1693
      %v1774 = vunpack.c.l.b16 %v1694
      %v1775 = vunpack.c.l.b16 %v1695
      %v1776 = vunpack.c.l.b16 %v1696
      %v1777 = vunpack.c.l.b16 %v1697
      %v1778 = vunpack.c.l.b16 %v1698
      %v1779 = vunpack.c.l.b16 %v1699
      %v1780 = vunpack.c.l.b16 %v1700
      %v1781 = vunpack.c.l.b16 %v1701
      %v1782 = vunpack.c.l.b16 %v1702
      %v1783 = vunpack.c.l.b16 %v1703
      %v1784 = vunpack.c.l.b16 %v1704
      %v1785 = vunpack.c.l.b16 %v1705
      %v1786 = vunpack.c.l.b16 %v1706
      %v1787 = vunpack.c.l.b16 %v1707
      %v1788 = vunpack.c.l.b16 %v1708
      %v1789 = vunpack.c.l.b16 %v1709
      %v1790 = vunpack.c.l.b16 %v1710
      %v1791 = vunpack.c.l.b16 %v1711
      %v1792 = vunpack.c.l.b16 %v1712
      %v1793 = vunpack.c.l.b16 %v1713
      %v1794 = vunpack.c.l.b16 %v1714
      %v1795 = vunpack.c.l.b16 %v1715
      %v1796 = vunpack.c.l.b16 %v1716
      %v1797 = vunpack.c.l.b16 %v1717
      %v1798 = vpack.c.b16 %v1767, %v1766
      %v1799 = vpack.c.b16 %v1769, %v1768
      %v1800 = vpack.c.b16 %v1771, %v1770
      %v1801 = vpack.c.b16 %v1773, %v1772
      %v1802 = vpack.c.b16 %v1775, %v1774
      %v1803 = vpack.c.b16 %v1777, %v1776
      %v1804 = vpack.c.b16 %v1779, %v1778
      %v1805 = vpack.c.b16 %v1781, %v1780
      %v1806 = vpack.c.b16 %v1783, %v1782
      %v1807 = vpack.c.b16 %v1785, %v1784
      %v1808 = vpack.c.b16 %v1787, %v1786
      %v1809 = vpack.c.b16 %v1789, %v1788
      %v1810 = vpack.c.b16 %v1791, %v1790
      %v1811 = vpack.c.b16 %v1793, %v1792
      %v1812 = vpack.c.b16 %v1795, %v1794
      %v1813 = vpack.c.b16 %v1797, %v1796
      %v1846 = vunpack.c.l.b16 %v1718
      %v1847 = vunpack.c.l.b16 %v1719
      %v1848 = vunpack.c.l.b16 %v1720
      %v1849 = vunpack.c.l.b16 %v1721
      %v1850 = vunpack.c.l.b16 %v1722
      %v1851 = vunpack.c.l.b16 %v1723
      %v1852 = vunpack.c.l.b16 %v1724
      %v1853 = vunpack.c.l.b16 %v1725
      %v1854 = vunpack.c.l.b16 %v1726
      %v1855 = vunpack.c.l.b16 %v1727
      %v1856 = vunpack.c.l.b16 %v1728
      %v1857 = vunpack.c.l.b16 %v1729
      %v1858 = vunpack.c.l.b16 %v1730
      %v1859 = vunpack.c.l.b16 %v1731
      %v1860 = vunpack.c.l.b16 %v1732
      %v1861 = vunpack.c.l.b16 %v1733
      %v1862 = vpack.c.b16 %v1847, %v1846
      %v1863 = vpack.c.b16 %v1849, %v1848
      %v1864 = vpack.c.b16 %v1851, %v1850
      %v1865 = vpack.c.b16 %v1853, %v1852
      %v1866 = vpack.c.b16 %v1855, %v1854
      %v1867 = vpack.c.b16 %v1857, %v1856
      %v1868 = vpack.c.b16 %v1859, %v1858
      %v1869 = vpack.c.b16 %v1861, %v1860
      %1878 = vmatprep.subr.bf16.mxu0 0
      %1879 = vmatpush1.bf16.msra.mxu0 %v1869
      %1880 = vmatprep.subr.bf16.mxu0 0
      %1881 = vmatpush1.bf16.msra.mxu0 %v1868
      %1882 = vmatprep.subr.bf16.mxu0 0
      %1883 = vmatpush1.bf16.msra.mxu0 %v1867
      %1884 = vmatprep.subr.bf16.mxu0 0
      %1885 = vmatpush1.bf16.msra.mxu0 %v1866
      %1886 = vmatprep.subr.bf16.mxu0 0
      %1887 = vmatpush1.bf16.msra.mxu0 %v1865
      %1888 = vmatprep.subr.bf16.mxu0 0
      %1889 = vmatpush1.bf16.msra.mxu0 %v1864
      %1890 = vmatprep.subr.bf16.mxu0 0
      %1891 = vmatpush1.bf16.msra.mxu0 %v1863
      %1892 = vmatprep.subr.bf16.mxu0 0
      %1893 = vmatpush1.bf16.msra.mxu0 %v1862
      %1894 = vmatprep.subr.bf16.mxu0 0
      %1895 = vmatpush2.bf16.msra.mxu0 0
      %1896 = vmatprep.subr.bf16.mxu0 0
      %1897 = vmatpush2.bf16.msra.mxu0 0
      %1898 = vmatprep.subr.bf16.mxu0 0
      %1899 = vmatpush2.bf16.msra.mxu0 0
      %1900 = vmatprep.subr.bf16.mxu0 0
      %1901 = vmatpush2.bf16.msra.mxu0 0
      %1902 = vmatprep.subr.bf16.mxu0 0
      %1903 = vmatpush2.bf16.msra.mxu0 0
      %1904 = vmatprep.subr.bf16.mxu0 0
      %1905 = vmatpush2.bf16.msra.mxu0 0
      %1906 = vmatprep.subr.bf16.mxu0 0
      %1907 = vmatpush2.bf16.msra.mxu0 0
      %1908 = vmatprep.subr.bf16.mxu0 0
      %1909 = vmatpush2.bf16.msra.mxu0 0
      %1910 = vmatprep.mubr.bf16.mxu0 0
      %1911 = vmatmul.mubr.bf16.gmra.mxu0 %v1798
      %v1912 = vpop.f32.mrf.mxu0
      %v1913 = vadd.f32 0.0, %v1912
      %v1914 = vpop.f32.mrf.mxu0
      %v1915 = vpop.f32.mrf.mxu0
      %v1916 = vadd.f32 0.0, %v1915
      %v1917 = vpop.f32.mrf.mxu0
      %1918 = vmatprep.mubr.bf16.mxu0 0
      %1919 = vmatmul.mubr.bf16.gmra.mxu0 %v1799
      %v1920 = vpop.f32.mrf.mxu0
      %v1921 = vadd.f32 0.0, %v1920
      %v1922 = vpop.f32.mrf.mxu0
      %v1923 = vpop.f32.mrf.mxu0
      %v1924 = vadd.f32 0.0, %v1923
      %v1925 = vpop.f32.mrf.mxu0
      %1926 = vmatprep.mubr.bf16.mxu0 0
      %1927 = vmatmul.mubr.bf16.gmra.mxu0 %v1800
      %v1928 = vpop.f32.mrf.mxu0
      %v1929 = vadd.f32 0.0, %v1928
      %v1930 = vpop.f32.mrf.mxu0
      %v1931 = vpop.f32.mrf.mxu0
      %v1932 = vadd.f32 0.0, %v1931
      %v1933 = vpop.f32.mrf.mxu0
      %1934 = vmatprep.mubr.bf16.mxu0 0
      %1935 = vmatmul.mubr.bf16.gmra.mxu0 %v1801
      %v1936 = vpop.f32.mrf.mxu0
      %v1937 = vadd.f32 0.0, %v1936
      %v1938 = vpop.f32.mrf.mxu0
      %v1939 = vpop.f32.mrf.mxu0
      %v1940 = vadd.f32 0.0, %v1939
      %v1941 = vpop.f32.mrf.mxu0
      %1942 = vmatprep.mubr.bf16.mxu0 0
      %1943 = vmatmul.mubr.bf16.gmra.mxu0 %v1802
      %v1944 = vpop.f32.mrf.mxu0
      %v1945 = vadd.f32 0.0, %v1944
      %v1946 = vpop.f32.mrf.mxu0
      %v1947 = vpop.f32.mrf.mxu0
      %v1948 = vadd.f32 0.0, %v1947
      %v1949 = vpop.f32.mrf.mxu0
      %1950 = vmatprep.mubr.bf16.mxu0 0
      %1951 = vmatmul.mubr.bf16.gmra.mxu0 %v1803
      %v1952 = vpop.f32.mrf.mxu0
      %v1953 = vadd.f32 0.0, %v1952
      %v1954 = vpop.f32.mrf.mxu0
      %v1955 = vpop.f32.mrf.mxu0
      %v1956 = vadd.f32 0.0, %v1955
      %v1957 = vpop.f32.mrf.mxu0
      %1958 = vmatprep.mubr.bf16.mxu0 0
      %1959 = vmatmul.mubr.bf16.gmra.mxu0 %v1804
      %v1960 = vpop.f32.mrf.mxu0
      %v1961 = vadd.f32 0.0, %v1960
      %v1962 = vpop.f32.mrf.mxu0
      %v1963 = vpop.f32.mrf.mxu0
      %v1964 = vadd.f32 0.0, %v1963
      %v1965 = vpop.f32.mrf.mxu0
      %1966 = vmatprep.mubr.bf16.mxu0 0
      %1967 = vmatmul.mubr.bf16.gmra.mxu0 %v1805
      %v1968 = vpop.f32.mrf.mxu0
      %v1969 = vadd.f32 0.0, %v1968
      %v1970 = vpop.f32.mrf.mxu0
      %v1971 = vpop.f32.mrf.mxu0
      %v1972 = vadd.f32 0.0, %v1971
      %v1973 = vpop.f32.mrf.mxu0
      %1974 = vmatprep.mubr.bf16.mxu0 0
      %1975 = vmatmul.mubr.bf16.gmra.mxu0 %v1806
      %v1976 = vpop.f32.mrf.mxu0
      %v1977 = vadd.f32 0.0, %v1976
      %v1978 = vpop.f32.mrf.mxu0
      %v1979 = vpop.f32.mrf.mxu0
      %v1980 = vadd.f32 0.0, %v1979
      %v1981 = vpop.f32.mrf.mxu0
      %1982 = vmatprep.mubr.bf16.mxu0 0
      %1983 = vmatmul.mubr.bf16.gmra.mxu0 %v1807
      %v1984 = vpop.f32.mrf.mxu0
      %v1985 = vadd.f32 0.0, %v1984
      %v1986 = vpop.f32.mrf.mxu0
      %v1987 = vpop.f32.mrf.mxu0
      %v1988 = vadd.f32 0.0, %v1987
      %v1989 = vpop.f32.mrf.mxu0
      %1990 = vmatprep.mubr.bf16.mxu0 0
      %1991 = vmatmul.mubr.bf16.gmra.mxu0 %v1808
      %v1992 = vpop.f32.mrf.mxu0
      %v1993 = vadd.f32 0.0, %v1992
      %v1994 = vpop.f32.mrf.mxu0
      %v1995 = vpop.f32.mrf.mxu0
      %v1996 = vadd.f32 0.0, %v1995
      %v1997 = vpop.f32.mrf.mxu0
      %1998 = vmatprep.mubr.bf16.mxu0 0
      %1999 = vmatmul.mubr.bf16.gmra.mxu0 %v1809
      %v2000 = vpop.f32.mrf.mxu0
      %v2001 = vadd.f32 0.0, %v2000
      %v2002 = vpop.f32.mrf.mxu0
      %v2003 = vpop.f32.mrf.mxu0
      %v2004 = vadd.f32 0.0, %v2003
      %v2005 = vpop.f32.mrf.mxu0
      %2006 = vmatprep.mubr.bf16.mxu0 0
      %2007 = vmatmul.mubr.bf16.gmra.mxu0 %v1810
      %v2008 = vpop.f32.mrf.mxu0
      %v2009 = vadd.f32 0.0, %v2008
      %v2010 = vpop.f32.mrf.mxu0
      %v2011 = vpop.f32.mrf.mxu0
      %v2012 = vadd.f32 0.0, %v2011
      %v2013 = vpop.f32.mrf.mxu0
      %2014 = vmatprep.mubr.bf16.mxu0 0
      %2015 = vmatmul.mubr.bf16.gmra.mxu0 %v1811
      %v2016 = vpop.f32.mrf.mxu0
      %v2017 = vadd.f32 0.0, %v2016
      %v2018 = vpop.f32.mrf.mxu0
      %v2019 = vpop.f32.mrf.mxu0
      %v2020 = vadd.f32 0.0, %v2019
      %v2021 = vpop.f32.mrf.mxu0
      %2022 = vmatprep.mubr.bf16.mxu0 0
      %2023 = vmatmul.mubr.bf16.gmra.mxu0 %v1812
      %v2024 = vpop.f32.mrf.mxu0
      %v2025 = vadd.f32 0.0, %v2024
      %v2026 = vpop.f32.mrf.mxu0
      %v2027 = vpop.f32.mrf.mxu0
      %v2028 = vadd.f32 0.0, %v2027
      %v2029 = vpop.f32.mrf.mxu0
      %2030 = vmatprep.mubr.bf16.mxu0 0
      %2031 = vmatmul.mubr.bf16.gmra.mxu0 %v1813
      %v2032 = vpop.f32.mrf.mxu0
      %v2033 = vadd.f32 0.0, %v2032
      %v2034 = vpop.f32.mrf.mxu0
      %v2035 = vpop.f32.mrf.mxu0
      %v2036 = vadd.f32 0.0, %v2035
      %v2037 = vpop.f32.mrf.mxu0
      %2038 = vdwg.mxu0
      %v2039 = vadd.f32 %v1654, %v1913
      %v2040 = vadd.f32 %v1655, %v1916
      %v2041 = vadd.f32 %v1656, %v1921
      %v2042 = vadd.f32 %v1657, %v1924
      %v2043 = vadd.f32 %v1658, %v1929
      %v2044 = vadd.f32 %v1659, %v1932
      %v2045 = vadd.f32 %v1660, %v1937
      %v2046 = vadd.f32 %v1661, %v1940
      %v2047 = vadd.f32 %v1662, %v1945
      %v2048 = vadd.f32 %v1663, %v1948
      %v2049 = vadd.f32 %v1664, %v1953
      %v2050 = vadd.f32 %v1665, %v1956
      %v2051 = vadd.f32 %v1666, %v1961
      %v2052 = vadd.f32 %v1667, %v1964
      %v2053 = vadd.f32 %v1668, %v1969
      %v2054 = vadd.f32 %v1669, %v1972
      %v2055 = vadd.f32 %v1670, %v1977
      %v2056 = vadd.f32 %v1671, %v1980
      %v2057 = vadd.f32 %v1672, %v1985
      %v2058 = vadd.f32 %v1673, %v1988
      %v2059 = vadd.f32 %v1674, %v1993
      %v2060 = vadd.f32 %v1675, %v1996
      %v2061 = vadd.f32 %v1676, %v2001
      %v2062 = vadd.f32 %v1677, %v2004
      %v2063 = vadd.f32 %v1678, %v2009
      %v2064 = vadd.f32 %v1679, %v2012
      %v2065 = vadd.f32 %v1680, %v2017
      %v2066 = vadd.f32 %v1681, %v2020
      %v2067 = vadd.f32 %v1682, %v2025
      %v2068 = vadd.f32 %v1683, %v2028
      %v2069 = vadd.f32 %v1684, %v2033
      %v2070 = vadd.f32 %v1685, %v2036
      %2071 = vst [vmem:[#allocation2] sm:$0xff] %v2039
      %2072 = vst [vmem:[#allocation2 + $0x8] sm:$0xff] %v2040
      %2073 = vst [vmem:[#allocation2 + $0x10] sm:$0xff] %v2041
      %2074 = vst [vmem:[#allocation2 + $0x18] sm:$0xff] %v2042
      %2075 = vst [vmem:[#allocation2 + $0x20] sm:$0xff] %v2043
      %2076 = vst [vmem:[#allocation2 + $0x28] sm:$0xff] %v2044
      %2077 = vst [vmem:[#allocation2 + $0x30] sm:$0xff] %v2045
      %2078 = vst [vmem:[#allocation2 + $0x38] sm:$0xff] %v2046
      %2079 = vst [vmem:[#allocation2 + $0x40] sm:$0xff] %v2047
      %2080 = vst [vmem:[#allocation2 + $0x48] sm:$0xff] %v2048
      %2081 = vst [vmem:[#allocation2 + $0x50] sm:$0xff] %v2049
      %2082 = vst [vmem:[#allocation2 + $0x58] sm:$0xff] %v2050
      %2083 = vst [vmem:[#allocation2 + $0x60] sm:$0xff] %v2051
      %2084 = vst [vmem:[#allocation2 + $0x68] sm:$0xff] %v2052
      %2085 = vst [vmem:[#allocation2 + $0x70] sm:$0xff] %v2053
      %2086 = vst [vmem:[#allocation2 + $0x78] sm:$0xff] %v2054
      %2087 = vst [vmem:[#allocation2 + $0x80] sm:$0xff] %v2055
      %2088 = vst [vmem:[#allocation2 + $0x88] sm:$0xff] %v2056
      %2089 = vst [vmem:[#allocation2 + $0x90] sm:$0xff] %v2057
      %2090 = vst [vmem:[#allocation2 + $0x98] sm:$0xff] %v2058
      %2091 = vst [vmem:[#allocation2 + $0xa0] sm:$0xff] %v2059
      %2092 = vst [vmem:[#allocation2 + $0xa8] sm:$0xff] %v2060
      %2093 = vst [vmem:[#allocation2 + $0xb0] sm:$0xff] %v2061
      %2094 = vst [vmem:[#allocation2 + $0xb8] sm:$0xff] %v2062
      %2095 = vst [vmem:[#allocation2 + $0xc0] sm:$0xff] %v2063
      %2096 = vst [vmem:[#allocation2 + $0xc8] sm:$0xff] %v2064
      %2097 = vst [vmem:[#allocation2 + $0xd0] sm:$0xff] %v2065
      %2098 = vst [vmem:[#allocation2 + $0xd8] sm:$0xff] %v2066
      %2099 = vst [vmem:[#allocation2 + $0xe0] sm:$0xff] %v2067
      %2100 = vst [vmem:[#allocation2 + $0xe8] sm:$0xff] %v2068
      %2101 = vst [vmem:[#allocation2 + $0xf0] sm:$0xff] %v2069
      %2102 = vst [vmem:[#allocation2 + $0xf8] sm:$0xff] %v2070
      // Predicated region
      $region33: #{cnn_block_forward.4} parent=27 // pred_check
        %p2103 = pneg %p1618
      $region34: #{cnn_block_forward.4} parent=27 // pred_check_branch
        %2105 = sbr.rel (%p2103) target = $region36
      $region35: #{cnn_block_forward.4} parent=27 // pred_region
        %v2106 = vld [vmem:[#allocation2] sm:$0xff]
        %v2107 = vld [vmem:[#allocation2 + $0x8] sm:$0xff]
        %v2108 = vld [vmem:[#allocation2 + $0x10] sm:$0xff]
        %v2109 = vld [vmem:[#allocation2 + $0x18] sm:$0xff]
        %v2110 = vld [vmem:[#allocation2 + $0x20] sm:$0xff]
        %v2111 = vld [vmem:[#allocation2 + $0x28] sm:$0xff]
        %v2112 = vld [vmem:[#allocation2 + $0x30] sm:$0xff]
        %v2113 = vld [vmem:[#allocation2 + $0x38] sm:$0xff]
        %v2114 = vld [vmem:[#allocation2 + $0x40] sm:$0xff]
        %v2115 = vld [vmem:[#allocation2 + $0x48] sm:$0xff]
        %v2116 = vld [vmem:[#allocation2 + $0x50] sm:$0xff]
        %v2117 = vld [vmem:[#allocation2 + $0x58] sm:$0xff]
        %v2118 = vld [vmem:[#allocation2 + $0x60] sm:$0xff]
        %v2119 = vld [vmem:[#allocation2 + $0x68] sm:$0xff]
        %v2120 = vld [vmem:[#allocation2 + $0x70] sm:$0xff]
        %v2121 = vld [vmem:[#allocation2 + $0x78] sm:$0xff]
        %v2122 = vld [vmem:[#allocation2 + $0x80] sm:$0xff]
        %v2123 = vld [vmem:[#allocation2 + $0x88] sm:$0xff]
        %v2124 = vld [vmem:[#allocation2 + $0x90] sm:$0xff]
        %v2125 = vld [vmem:[#allocation2 + $0x98] sm:$0xff]
        %v2126 = vld [vmem:[#allocation2 + $0xa0] sm:$0xff]
        %v2127 = vld [vmem:[#allocation2 + $0xa8] sm:$0xff]
        %v2128 = vld [vmem:[#allocation2 + $0xb0] sm:$0xff]
        %v2129 = vld [vmem:[#allocation2 + $0xb8] sm:$0xff]
        %v2130 = vld [vmem:[#allocation2 + $0xc0] sm:$0xff]
        %v2131 = vld [vmem:[#allocation2 + $0xc8] sm:$0xff]
        %v2132 = vld [vmem:[#allocation2 + $0xd0] sm:$0xff]
        %v2133 = vld [vmem:[#allocation2 + $0xd8] sm:$0xff]
        %v2134 = vld [vmem:[#allocation2 + $0xe0] sm:$0xff]
        %v2135 = vld [vmem:[#allocation2 + $0xe8] sm:$0xff]
        %v2136 = vld [vmem:[#allocation2 + $0xf0] sm:$0xff]
        %v2137 = vld [vmem:[#allocation2 + $0xf8] sm:$0xff]
        %v2138 = vpack.c.bf16 %v2107, %v2106
        %v2139 = vpack.c.bf16 %v2109, %v2108
        %v2140 = vpack.c.bf16 %v2111, %v2110
        %v2141 = vpack.c.bf16 %v2113, %v2112
        %v2142 = vpack.c.bf16 %v2115, %v2114
        %v2143 = vpack.c.bf16 %v2117, %v2116
        %v2144 = vpack.c.bf16 %v2119, %v2118
        %v2145 = vpack.c.bf16 %v2121, %v2120
        %v2146 = vpack.c.bf16 %v2123, %v2122
        %v2147 = vpack.c.bf16 %v2125, %v2124
        %v2148 = vpack.c.bf16 %v2127, %v2126
        %v2149 = vpack.c.bf16 %v2129, %v2128
        %v2150 = vpack.c.bf16 %v2131, %v2130
        %v2151 = vpack.c.bf16 %v2133, %v2132
        %v2152 = vpack.c.bf16 %v2135, %v2134
        %v2153 = vpack.c.bf16 %v2137, %v2136
        %v2170 = vunpack.c.l.b16 %v2138
        %v2171 = vunpack.c.h.b16 %v2138
        %v2172 = vunpack.c.l.b16 %v2139
        %v2173 = vunpack.c.h.b16 %v2139
        %v2174 = vunpack.c.l.b16 %v2140
        %v2175 = vunpack.c.h.b16 %v2140
        %v2176 = vunpack.c.l.b16 %v2141
        %v2177 = vunpack.c.h.b16 %v2141
        %v2178 = vunpack.c.l.b16 %v2142
        %v2179 = vunpack.c.h.b16 %v2142
        %v2180 = vunpack.c.l.b16 %v2143
        %v2181 = vunpack.c.h.b16 %v2143
        %v2182 = vunpack.c.l.b16 %v2144
        %v2183 = vunpack.c.h.b16 %v2144
        %v2184 = vunpack.c.l.b16 %v2145
        %v2185 = vunpack.c.h.b16 %v2145
        %v2186 = vunpack.c.l.b16 %v2146
        %v2187 = vunpack.c.h.b16 %v2146
        %v2188 = vunpack.c.l.b16 %v2147
        %v2189 = vunpack.c.h.b16 %v2147
        %v2190 = vunpack.c.l.b16 %v2148
        %v2191 = vunpack.c.h.b16 %v2148
        %v2192 = vunpack.c.l.b16 %v2149
        %v2193 = vunpack.c.h.b16 %v2149
        %v2194 = vunpack.c.l.b16 %v2150
        %v2195 = vunpack.c.h.b16 %v2150
        %v2196 = vunpack.c.l.b16 %v2151
        %v2197 = vunpack.c.h.b16 %v2151
        %v2198 = vunpack.c.l.b16 %v2152
        %v2199 = vunpack.c.h.b16 %v2152
        %v2200 = vunpack.c.l.b16 %v2153
        %v2201 = vunpack.c.h.b16 %v2153
        %v2202 = vpack.c.b16 %v2170, %v2170
        %v2203 = vpack.c.b16 %v2171, %v2171
        %v2204 = vpack.c.b16 %v2172, %v2172
        %v2205 = vpack.c.b16 %v2173, %v2173
        %v2206 = vpack.c.b16 %v2174, %v2174
        %v2207 = vpack.c.b16 %v2175, %v2175
        %v2208 = vpack.c.b16 %v2176, %v2176
        %v2209 = vpack.c.b16 %v2177, %v2177
        %v2210 = vpack.c.b16 %v2178, %v2178
        %v2211 = vpack.c.b16 %v2179, %v2179
        %v2212 = vpack.c.b16 %v2180, %v2180
        %v2213 = vpack.c.b16 %v2181, %v2181
        %v2214 = vpack.c.b16 %v2182, %v2182
        %v2215 = vpack.c.b16 %v2183, %v2183
        %v2216 = vpack.c.b16 %v2184, %v2184
        %v2217 = vpack.c.b16 %v2185, %v2185
        %v2218 = vpack.c.b16 %v2186, %v2186
        %v2219 = vpack.c.b16 %v2187, %v2187
        %v2220 = vpack.c.b16 %v2188, %v2188
        %v2221 = vpack.c.b16 %v2189, %v2189
        %v2222 = vpack.c.b16 %v2190, %v2190
        %v2223 = vpack.c.b16 %v2191, %v2191
        %v2224 = vpack.c.b16 %v2192, %v2192
        %v2225 = vpack.c.b16 %v2193, %v2193
        %v2226 = vpack.c.b16 %v2194, %v2194
        %v2227 = vpack.c.b16 %v2195, %v2195
        %v2228 = vpack.c.b16 %v2196, %v2196
        %v2229 = vpack.c.b16 %v2197, %v2197
        %v2230 = vpack.c.b16 %v2198, %v2198
        %v2231 = vpack.c.b16 %v2199, %v2199
        %v2232 = vpack.c.b16 %v2200, %v2200
        %v2233 = vpack.c.b16 %v2201, %v2201
        %2266 = vst [vmem:[%s306] sm:$0xf] %v2202
        %2267 = vst [vmem:[%s306 + $0x4] sm:$0xf] %v2203
        %2268 = vst [vmem:[%s306 + $0x8] sm:$0xf] %v2204
        %2269 = vst [vmem:[%s306 + $0xc] sm:$0xf] %v2205
        %2270 = vst [vmem:[%s306 + $0x10] sm:$0xf] %v2206
        %2271 = vst [vmem:[%s306 + $0x14] sm:$0xf] %v2207
        %2272 = vst [vmem:[%s306 + $0x18] sm:$0xf] %v2208
        %2273 = vst [vmem:[%s306 + $0x1c] sm:$0xf] %v2209
        %2274 = vst [vmem:[%s306 + $0x20] sm:$0xf] %v2210
        %2275 = vst [vmem:[%s306 + $0x24] sm:$0xf] %v2211
        %2276 = vst [vmem:[%s306 + $0x28] sm:$0xf] %v2212
        %2277 = vst [vmem:[%s306 + $0x2c] sm:$0xf] %v2213
        %2278 = vst [vmem:[%s306 + $0x30] sm:$0xf] %v2214
        %2279 = vst [vmem:[%s306 + $0x34] sm:$0xf] %v2215
        %2280 = vst [vmem:[%s306 + $0x38] sm:$0xf] %v2216
        %2281 = vst [vmem:[%s306 + $0x3c] sm:$0xf] %v2217
        %2282 = vst [vmem:[%s306 + $0x40] sm:$0xf] %v2218
        %2283 = vst [vmem:[%s306 + $0x44] sm:$0xf] %v2219
        %2284 = vst [vmem:[%s306 + $0x48] sm:$0xf] %v2220
        %2285 = vst [vmem:[%s306 + $0x4c] sm:$0xf] %v2221
        %2286 = vst [vmem:[%s306 + $0x50] sm:$0xf] %v2222
        %2287 = vst [vmem:[%s306 + $0x54] sm:$0xf] %v2223
        %2288 = vst [vmem:[%s306 + $0x58] sm:$0xf] %v2224
        %2289 = vst [vmem:[%s306 + $0x5c] sm:$0xf] %v2225
        %2290 = vst [vmem:[%s306 + $0x60] sm:$0xf] %v2226
        %2291 = vst [vmem:[%s306 + $0x64] sm:$0xf] %v2227
        %2292 = vst [vmem:[%s306 + $0x68] sm:$0xf] %v2228
        %2293 = vst [vmem:[%s306 + $0x6c] sm:$0xf] %v2229
        %2294 = vst [vmem:[%s306 + $0x70] sm:$0xf] %v2230
        %2295 = vst [vmem:[%s306 + $0x74] sm:$0xf] %v2231
        %2296 = vst [vmem:[%s306 + $0x78] sm:$0xf] %v2232
        %2297 = vst [vmem:[%s306 + $0x7c] sm:$0xf] %v2233
        %v2298 = vadd.f32 %v2106, %v2107
        %v2299 = vadd.f32 %v2298, %v2108
        %v2300 = vadd.f32 %v2299, %v2109
        %v2301 = vadd.f32 %v2300, %v2110
        %v2302 = vadd.f32 %v2301, %v2111
        %v2303 = vadd.f32 %v2302, %v2112
        %v2304 = vadd.f32 %v2303, %v2113
        %v2305 = vadd.f32 %v2304, %v2114
        %v2306 = vadd.f32 %v2305, %v2115
        %v2307 = vadd.f32 %v2306, %v2116
        %v2308 = vadd.f32 %v2307, %v2117
        %v2309 = vadd.f32 %v2308, %v2118
        %v2310 = vadd.f32 %v2309, %v2119
        %v2311 = vadd.f32 %v2310, %v2120
        %v2312 = vadd.f32 %v2311, %v2121
        %v2313 = vadd.f32 %v2312, %v2122
        %v2314 = vadd.f32 %v2313, %v2123
        %v2315 = vadd.f32 %v2314, %v2124
        %v2316 = vadd.f32 %v2315, %v2125
        %v2317 = vadd.f32 %v2316, %v2126
        %v2318 = vadd.f32 %v2317, %v2127
        %v2319 = vadd.f32 %v2318, %v2128
        %v2320 = vadd.f32 %v2319, %v2129
        %v2321 = vadd.f32 %v2320, %v2130
        %v2322 = vadd.f32 %v2321, %v2131
        %v2323 = vadd.f32 %v2322, %v2132
        %v2324 = vadd.f32 %v2323, %v2133
        %v2325 = vadd.f32 %v2324, %v2134
        %v2326 = vadd.f32 %v2325, %v2135
        %v2327 = vadd.f32 %v2326, %v2136
        %v2328 = vadd.f32 %v2327, %v2137
        %v2329 = vrot.slane %v2328, 4
        %v2330 = vadd.f32 %v2328, %v2329
        %v2331 = vrot.slane %v2330, 2
        %v2332 = vadd.f32 %v2330, %v2331
        %v2333 = vrot.slane %v2332, 1
        %v2334 = vadd.f32 %v2332, %v2333
        %v2335 = vmul.f32 %v2106, %v2106
        %v2336 = vmul.f32 %v2107, %v2107
        %v2337 = vmul.f32 %v2108, %v2108
        %v2338 = vmul.f32 %v2109, %v2109
        %v2339 = vmul.f32 %v2110, %v2110
        %v2340 = vmul.f32 %v2111, %v2111
        %v2341 = vmul.f32 %v2112, %v2112
        %v2342 = vmul.f32 %v2113, %v2113
        %v2343 = vmul.f32 %v2114, %v2114
        %v2344 = vmul.f32 %v2115, %v2115
        %v2345 = vmul.f32 %v2116, %v2116
        %v2346 = vmul.f32 %v2117, %v2117
        %v2347 = vmul.f32 %v2118, %v2118
        %v2348 = vmul.f32 %v2119, %v2119
        %v2349 = vmul.f32 %v2120, %v2120
        %v2350 = vmul.f32 %v2121, %v2121
        %v2351 = vmul.f32 %v2122, %v2122
        %v2352 = vmul.f32 %v2123, %v2123
        %v2353 = vmul.f32 %v2124, %v2124
        %v2354 = vmul.f32 %v2125, %v2125
        %v2355 = vmul.f32 %v2126, %v2126
        %v2356 = vmul.f32 %v2127, %v2127
        %v2357 = vmul.f32 %v2128, %v2128
        %v2358 = vmul.f32 %v2129, %v2129
        %v2359 = vmul.f32 %v2130, %v2130
        %v2360 = vmul.f32 %v2131, %v2131
        %v2361 = vmul.f32 %v2132, %v2132
        %v2362 = vmul.f32 %v2133, %v2133
        %v2363 = vmul.f32 %v2134, %v2134
        %v2364 = vmul.f32 %v2135, %v2135
        %v2365 = vmul.f32 %v2136, %v2136
        %v2366 = vmul.f32 %v2137, %v2137
        %v2367 = vadd.f32 %v2335, %v2336
        %v2368 = vadd.f32 %v2367, %v2337
        %v2369 = vadd.f32 %v2368, %v2338
        %v2370 = vadd.f32 %v2369, %v2339
        %v2371 = vadd.f32 %v2370, %v2340
        %v2372 = vadd.f32 %v2371, %v2341
        %v2373 = vadd.f32 %v2372, %v2342
        %v2374 = vadd.f32 %v2373, %v2343
        %v2375 = vadd.f32 %v2374, %v2344
        %v2376 = vadd.f32 %v2375, %v2345
        %v2377 = vadd.f32 %v2376, %v2346
        %v2378 = vadd.f32 %v2377, %v2347
        %v2379 = vadd.f32 %v2378, %v2348
        %v2380 = vadd.f32 %v2379, %v2349
        %v2381 = vadd.f32 %v2380, %v2350
        %v2382 = vadd.f32 %v2381, %v2351
        %v2383 = vadd.f32 %v2382, %v2352
        %v2384 = vadd.f32 %v2383, %v2353
        %v2385 = vadd.f32 %v2384, %v2354
        %v2386 = vadd.f32 %v2385, %v2355
        %v2387 = vadd.f32 %v2386, %v2356
        %v2388 = vadd.f32 %v2387, %v2357
        %v2389 = vadd.f32 %v2388, %v2358
        %v2390 = vadd.f32 %v2389, %v2359
        %v2391 = vadd.f32 %v2390, %v2360
        %v2392 = vadd.f32 %v2391, %v2361
        %v2393 = vadd.f32 %v2392, %v2362
        %v2394 = vadd.f32 %v2393, %v2363
        %v2395 = vadd.f32 %v2394, %v2364
        %v2396 = vadd.f32 %v2395, %v2365
        %v2397 = vadd.f32 %v2396, %v2366
        %v2398 = vrot.slane %v2397, 4
        %v2399 = vadd.f32 %v2397, %v2398
        %v2400 = vrot.slane %v2399, 2
        %v2401 = vadd.f32 %v2399, %v2400
        %v2402 = vrot.slane %v2401, 1
        %v2403 = vadd.f32 %v2401, %v2402
        %v2404 = vlaneseq
        %v2405 = vshrl.u32 %v2404, 7
        %vm2406 = vcmp.eq.s32.totalorder %v2405, 0
        %vm2407 = vcmp.eq.s32.totalorder %v2405, 1
        %v2408 = vsel %vm2407, %v2403, 0.0
        %v2409 = vsel %vm2406, %v2334, %v2408
        %2410 = vst [vmem:[%s314] sm:$0xff] %v2409
      $region36: #{cnn_block_forward.4} parent=27 // pred_fallthru
        _
      %s2411 = smul.u32 32, %s31
      %p2412 = scmp.lt.s32.totalorder %s2411, 63
      %s2413 = scalar_select %p2412, %s2411, 63
      %p2414 = scmp.lt.s32.totalorder %s32, 0
      %s2415 = scalar_select %p2414, %s32, 0
      %s2416 = sadd.s32 %s2415, %s2413
      %s2417 = smul.addr %s2416, 4
      %s2418 = scalar_lea.vmem %s3, %s2417
      %p2419 = scmp.lt.s32.totalorder %s31, 1
      %s2420 = scalar_select %p2419, %s31, 1
      %p2421 = scmp.lt.s32.totalorder %s32, 0
      %s2422 = scalar_select %p2421, %s32, 0
      %s2423 = sadd.s32 %s2422, %s2420
      %s2424 = smul.addr %s2423, 8
      %s2425 = scalar_lea.vmem %s4, %s2424
      // Predicated region
      $region37: #{cnn_block_forward.4} parent=27 // pred_check
        %p2426 = pneg %p121
      $region38: #{cnn_block_forward.4} parent=27 // pred_check_branch
        %2428 = sbr.rel (%p2426) target = $region40
      $region39: #{cnn_block_forward.4} parent=27 // pred_region
        %s2429 = smul.u32 32, %s31
      $region40: #{cnn_block_forward.4} parent=27 // pred_fallthru
        _
      // Predicated region
      $region41: #{cnn_block_forward.4} parent=27 // pred_check
        %p2430 = pneg %p149
      $region42: #{cnn_block_forward.4} parent=27 // pred_check_branch
        %2432 = sbr.rel (%p2430) target = $region44
      $region43: #{cnn_block_forward.4} parent=27 // pred_region
        _
      $region44: #{cnn_block_forward.4} parent=27 // pred_fallthru
        _
    $region28: #{cnn_block_forward.4} parent=5 // pred_fallthru
      _
    %p2433 = scmp.le.s32.totalorder 2, %s21
    // Predicated region
    $region45: #{cnn_block_forward.4} parent=5 // pred_check
      %p2434 = pneg %p2433
    $region46: #{cnn_block_forward.4} parent=5 // pred_check_branch
      %2436 = sbr.rel (%p2434) target = $region48
    $region47: #{cnn_block_forward.4} parent=5 // pred_region
      %s2437 = ssub.s32 %s21, 2
      // Predicated region
      $region49: #{cnn_block_forward.4} parent=47 // pred_check
        %p2438 = pneg %p127
      $region50: #{cnn_block_forward.4} parent=47 // pred_check_branch
        %2440 = sbr.rel (%p2438) target = $region52
      $region51: #{cnn_block_forward.4} parent=47 // pred_region
        %s2441 = smul.u32 32, %s34
        %p2442 = scmp.lt.s32.totalorder %s2441, 63
        %s2443 = scalar_select %p2442, %s2441, 63
        %p2444 = scmp.lt.s32.totalorder %s35, 0
        %s2445 = scalar_select %p2444, %s35, 0
        %s2446 = sadd.s32 %s2445, %s2443
        %s2447 = smul.addr %s2446, 4
        %s2448 = scalar_lea.vmem %s3, %s2447
      $region52: #{cnn_block_forward.4} parent=47 // pred_fallthru
        _
      // Predicated region
      $region53: #{cnn_block_forward.4} parent=47 // pred_check
        %p2449 = pneg %p155
      $region54: #{cnn_block_forward.4} parent=47 // pred_check_branch
        %2451 = sbr.rel (%p2449) target = $region56
      $region55: #{cnn_block_forward.4} parent=47 // pred_region
        %p2452 = scmp.lt.s32.totalorder %s34, 1
        %s2453 = scalar_select %p2452, %s34, 1
        %p2454 = scmp.lt.s32.totalorder %s35, 0
        %s2455 = scalar_select %p2454, %s35, 0
        %s2456 = sadd.s32 %s2455, %s2453
        %s2457 = smul.addr %s2456, 8
        %s2458 = scalar_lea.vmem %s4, %s2457
      $region56: #{cnn_block_forward.4} parent=47 // pred_fallthru
        _
    $region48: #{cnn_block_forward.4} parent=5 // pred_fallthru
      _
  $region6: #{cnn_block_forward.4} parent=0 // loop_footer
    %s25 = sadd.s32 1, %s21
  $region7: #{cnn_block_forward.4} parent=0 // loop_footer_branch
    %20 = sbr.rel target = $region3
  $region8: #{cnn_block_forward.4} parent=0 // loop_exit
    _

</llo_original>
